<compile_context>
chip_gen: v5e
topology: v5e:2x2
jax: 0.10.0
libtpu: 0.0.40
codegen_flags: <defaults>
</compile_context>

<pallas_src>
import functools

import jax
import jax.numpy as jnp
from jax.experimental import pallas as pl
from jax.experimental.pallas import tpu as pltpu


def _round_up(a: int, b: int) -> int:
    return -(-a // b) * b


def _cdiv(a: int, b: int) -> int:
    return -(-a // b)


def _tpu_defaults():
    """Returns (tm, tk, physical VMEM bytes, looks_like_v7x)."""
    try:
        vmem = int(pltpu.get_tpu_info().vmem_capacity_bytes)
    except Exception:  # pragma: no cover - be conservative if query fails
        vmem = 64 << 20
    if vmem <= (80 << 20):
        # v7x: 64 MiB VMEM per TensorCore, 2 TCs, ~3.2 TB/s HBM.
        return 512, 256, vmem, True
    # v5e / v6e: 128 MiB VMEM, 1 TensorCore. tm=1024 keeps v6e MXU-bound.
    return 1024, 512, vmem, False


def _ffn_kernel_resident(x_ref, w_in_ref, b_in_ref, w_out_ref, b_out_ref, o_ref,
                         *, approximate_gelu):
    # Weights fully resident in VMEM (constant index maps); one row tile per step.
    x = x_ref[...].astype(w_in_ref.dtype)                     # in-kernel bf16 cast
    h = jnp.dot(x, w_in_ref[...], preferred_element_type=jnp.float32)
    h = jax.nn.gelu(h + b_in_ref[...], approximate=approximate_gelu)
    out = jnp.dot(h.astype(w_out_ref.dtype), w_out_ref[...],
                  preferred_element_type=jnp.float32)
    o_ref[...] = (out + b_out_ref[...]).astype(o_ref.dtype)
    # Dropout (eval mode) is identity.


def _ffn_kernel_stream(x_ref, w_in_ref, b_in_ref, w_out_ref, b_out_ref, o_ref,
                       acc_ref, *, approximate_gelu):
    # Grid: (row tiles, H chunks). Axis 1 is the reduction over the hidden dim
    # for the second matmul; acc_ref is the resident (tm, D) f32 accumulator.
    k = pl.program_id(1)

    @pl.when(k == 0)
    def _init():
        acc_ref[...] = jnp.zeros_like(acc_ref)

    x = x_ref[...].astype(w_in_ref.dtype)                     # in-kernel bf16 cast
    h = jnp.dot(x, w_in_ref[...], preferred_element_type=jnp.float32)
    h = jax.nn.gelu(h + b_in_ref[...], approximate=approximate_gelu)
    acc_ref[...] += jnp.dot(h.astype(w_out_ref.dtype), w_out_ref[...],
                            preferred_element_type=jnp.float32)

    @pl.when(k == pl.num_programs(1) - 1)
    def _finalize():
        # b_out added exactly once; dropout (eval mode) is identity.
        o_ref[...] = (acc_ref[...] + b_out_ref[...]).astype(o_ref.dtype)


def feed_forward(x, w_in, b_in, w_out, b_out, *, tm=None, tk=None,
                 compute_dtype=jnp.bfloat16, approximate_gelu=True):
    """x: (B, S, D). w_in: (D, 4D), b_in: (4D,), w_out: (4D, D), b_out: (D,).

    Returns (B, S, D) in x.dtype. Matches eval-mode FeedForward.forward
    (tanh-approx GeLU by default; pass approximate_gelu=False for exact erf).
    """
    B, S, D = x.shape
    H = w_in.shape[1]
    M = B * S

    tm_def, tk_def, vmem_cap, is_v7x = _tpu_defaults()
    tm = tm_def if tm is None else tm
    tk = tk_def if tk is None else tk
    budget = int(vmem_cap * 0.85)            # headroom for Mosaic internals

    x_bytes = jnp.dtype(x.dtype).itemsize
    out_bytes = x_bytes
    w_bytes = jnp.dtype(compute_dtype).itemsize

    def footprint(tm_, tk_, resident):
        # Double-buffered pipeline tiles + scratch + in-kernel temporaries.
        tiles = (2 * tm_ * D * x_bytes                 # x tile (native dtype)
                 + 2 * D * tk_ * w_bytes               # W_in chunk
                 + 2 * tk_ * D * w_bytes               # W_out chunk
                 + 2 * 8 * tk_ * 4 + 2 * 8 * D * 4     # biases (sublane-padded)
                 + 2 * tm_ * D * out_bytes)            # out tile
        if not resident:
            tiles += tm_ * D * 4                       # f32 accumulator scratch
        temps = (tm_ * tk_ * 4 + tm_ * tk_ * w_bytes   # hidden chunk f32 + bf16
                 + tm_ * D * w_bytes)                  # in-kernel bf16 x cast
        return tiles + temps

    # Row tile: as large as possible, rounded to the sublane (8) granule so a
    # small / ragged M does not blow up padding (e.g. M=257 -> 264, not 512).
    tm_eff = min(tm, _round_up(M, 8))

    # Small-model fast path: both weight matrices stay resident in VMEM.
    resident = footprint(tm_eff, H, True) <= budget
    if resident:
        tk_eff = H
    else:
        # Largest multiple of 128 that divides H and is <= tk (fallback: H).
        tk_eff = H
        for cand in range((min(tk, H) // 128) * 128, 0, -128):
            if H % cand == 0:
                tk_eff = cand
                break
        # Shrink tiles until the footprint fits physical VMEM (tk first: it is
        # the VMEM lever; tm is the arithmetic-intensity lever).
        while (footprint(tm_eff, tk_eff, False) > budget and tk_eff >= 256
               and (tk_eff // 2) % 128 == 0 and H % (tk_eff // 2) == 0):
            tk_eff //= 2
        while footprint(tm_eff, tk_eff, False) > budget and tm_eff > 128:
            tm_eff = max(128, _round_up(tm_eff // 2, 8))

    # v7x megacore: give both TensorCores a row tile when there is enough work.
    if is_v7x and tm_eff > 128 and _cdiv(_round_up(M, 8), tm_eff) < 2:
        tm_eff = _round_up(_cdiv(M, 2), 8)

    Mp = _round_up(M, tm_eff)
    n_row_tiles = Mp // tm_eff

    # x stays in its native dtype in HBM (bf16 cast happens inside the kernel).
    x2d = x.reshape(M, D)
    if Mp != M:
        x2d = jnp.pad(x2d, ((0, Mp - M), (0, 0)))
    # Weights: cast only if the caller did not already store them in bf16.
    w_in_c = w_in if w_in.dtype == compute_dtype else w_in.astype(compute_dtype)
    w_out_c = w_out if w_out.dtype == compute_dtype else w_out.astype(compute_dtype)
    b_in2d = b_in.reshape(1, H).astype(jnp.float32)
    b_out2d = b_out.reshape(1, D).astype(jnp.float32)

    vmem_limit = int(min(vmem_cap,
                         max(32 << 20,
                             footprint(tm_eff, tk_eff, resident) * 5 // 4)))

    # Weights are re-streamed once per row tile in the streaming path.
    weight_reads = 1 if resident else n_row_tiles
    cost = pl.CostEstimate(
        flops=4 * Mp * D * H,                    # two matmuls, 2*M*D*H each
        transcendentals=Mp * H,                  # one tanh/erf per hidden elem
        bytes_accessed=(Mp * D * x_bytes
                        + 2 * D * H * w_bytes * weight_reads
                        + (H + D) * 4
                        + Mp * D * out_bytes),
    )

    if resident:
        grid = (n_row_tiles,)
        in_specs = [
            pl.BlockSpec((tm_eff, D), lambda i: (i, 0)),   # x row tile
            pl.BlockSpec((D, H),      lambda i: (0, 0)),   # W_in (resident)
            pl.BlockSpec((1, H),      lambda i: (0, 0)),   # b_in (resident)
            pl.BlockSpec((H, D),      lambda i: (0, 0)),   # W_out (resident)
            pl.BlockSpec((1, D),      lambda i: (0, 0)),   # b_out (resident)
        ]
        out_specs = pl.BlockSpec((tm_eff, D), lambda i: (i, 0))
        scratch_shapes = []
        kernel = functools.partial(_ffn_kernel_resident,
                                   approximate_gelu=approximate_gelu)
        dim_sem = ("parallel",)
    else:
        grid = (n_row_tiles, H // tk_eff)
        in_specs = [
            pl.BlockSpec((tm_eff, D), lambda i, k: (i, 0)),   # x row tile
            pl.BlockSpec((D, tk_eff), lambda i, k: (0, k)),   # W_in col chunk
            pl.BlockSpec((1, tk_eff), lambda i, k: (0, k)),   # b_in chunk
            pl.BlockSpec((tk_eff, D), lambda i, k: (k, 0)),   # W_out row chunk
            pl.BlockSpec((1, D),      lambda i, k: (0, 0)),   # b_out
        ]
        out_specs = pl.BlockSpec((tm_eff, D), lambda i, k: (i, 0))
        scratch_shapes = [pltpu.VMEM((tm_eff, D), jnp.float32)]
        kernel = functools.partial(_ffn_kernel_stream,
                                   approximate_gelu=approximate_gelu)
        dim_sem = ("parallel", "arbitrary")

    out2d = pl.pallas_call(
        kernel,
        out_shape=jax.ShapeDtypeStruct((Mp, D), x.dtype),
        grid_spec=pltpu.PrefetchScalarGridSpec(
            num_scalar_prefetch=0,
            grid=grid,
            in_specs=in_specs,
            out_specs=out_specs,
            scratch_shapes=scratch_shapes,
        ),
        compiler_params=pltpu.CompilerParams(
            dimension_semantics=dim_sem,
            vmem_limit_bytes=vmem_limit),
        cost_estimate=cost,
    )(x2d, w_in_c, b_in2d, w_out_c, b_out2d)

    if Mp != M:
        out2d = out2d[:M]
    return out2d.reshape(B, S, D)


if __name__ == "__main__":
    # Small shapes consistent with the module's forward (x is B x S x D).
    # D is a multiple of 128 so output stores stay lane-dense.
    B, S, D = 2, 64, 128
    H = 4 * D

    key = jax.random.PRNGKey(0)
    kx, kw1, kb1, kw2, kb2 = jax.random.split(key, 5)

    # Deterministic parameter init (PyTorch nn.Linear-style uniform bounds).
    bound_in = 1.0 / (D ** 0.5)
    bound_out = 1.0 / (H ** 0.5)
    w_in = jax.random.uniform(kw1, (D, H), jnp.float32, -bound_in, bound_in)
    b_in = jax.random.uniform(kb1, (H,), jnp.float32, -bound_in, bound_in)
    w_out = jax.random.uniform(kw2, (H, D), jnp.float32, -bound_out, bound_out)
    b_out = jax.random.uniform(kb2, (D,), jnp.float32, -bound_out, bound_out)

    x = jax.random.normal(kx, (B, S, D), jnp.float32)

    z = feed_forward(x, w_in, b_in, w_out, b_out)
    jax.block_until_ready(z)

    # Pure-JAX reference mirroring the kernel's bf16 compute / f32 accumulate
    # and the tanh-approximate GeLU used by default.
    xb = x.reshape(-1, D).astype(jnp.bfloat16).astype(jnp.float32)
    w1b = w_in.astype(jnp.bfloat16).astype(jnp.float32)
    w2b = w_out.astype(jnp.bfloat16).astype(jnp.float32)
    h_ref = jax.nn.gelu(xb @ w1b + b_in, approximate=True)
    h_ref = h_ref.astype(jnp.bfloat16).astype(jnp.float32)
    ref = (h_ref @ w2b + b_out).reshape(B, S, D)

    assert z.shape == (B, S, D)
    assert z.dtype == x.dtype
    assert jnp.allclose(z, ref, atol=1e-2, rtol=1e-2), "mismatch vs reference"

    print("KERNEL_OK")
</pallas_src>

<mosaic_0001>
module attributes {stable_mosaic.version = 11 : i64} {
  func.func @_ffn_kernel_resident(%arg0: i32, %arg1: memref<128x128xf32, #tpu.memory_space<vmem>>, %arg2: memref<128x512xbf16, #tpu.memory_space<vmem>>, %arg3: memref<1x512xf32, #tpu.memory_space<vmem>>, %arg4: memref<512x128xbf16, #tpu.memory_space<vmem>>, %arg5: memref<1x128xf32, #tpu.memory_space<vmem>>, %arg6: memref<128x128xf32, #tpu.memory_space<vmem>>) attributes {dimension_semantics = [#tpu.dimension_semantics<parallel>], iteration_bounds = array<i64: 1>, scalar_prefetch = 0 : i64, scratch_operands = 0 : i64, tpu.core_type = #tpu.core_type<tc>, window_params = [{transform_indices = @transform_0, window_bounds = array<i64: 128, 128>}, {pipeline_mode = #tpu.pipeline_mode<synchronous>, transform_indices = @transform_1, window_bounds = array<i64: 128, 512>}, {pipeline_mode = #tpu.pipeline_mode<synchronous>, transform_indices = @transform_2, window_bounds = array<i64: 1, 512>}, {pipeline_mode = #tpu.pipeline_mode<synchronous>, transform_indices = @transform_3, window_bounds = array<i64: 512, 128>}, {pipeline_mode = #tpu.pipeline_mode<synchronous>, transform_indices = @transform_4, window_bounds = array<i64: 1, 128>}, {transform_indices = @transform_5, window_bounds = array<i64: 128, 128>}]} {
    %c0 = arith.constant 0 : index
    %c0_0 = arith.constant 0 : index
    %0 = vector.load %arg1[%c0, %c0_0] : memref<128x128xf32, #tpu.memory_space<vmem>>, vector<128x128xf32>
    %1 = arith.truncf %0 : vector<128x128xf32> to vector<128x128xbf16>
    %c0_1 = arith.constant 0 : index
    %c0_2 = arith.constant 0 : index
    %2 = vector.load %arg2[%c0_1, %c0_2] : memref<128x512xbf16, #tpu.memory_space<vmem>>, vector<128x512xbf16>
    %cst = arith.constant dense<0.000000e+00> : vector<128x512xf32>
    %3 = tpu.matmul %1, %2, %cst {dimension_numbers = #tpu.dot_dimension_numbers<[1], [0], [0], [1], [0, 0, 1, 1], [], []>} : vector<128x128xbf16>, vector<128x512xbf16>, vector<128x512xf32> -> vector<128x512xf32>
    %c0_3 = arith.constant 0 : index
    %c0_4 = arith.constant 0 : index
    %4 = vector.load %arg3[%c0_3, %c0_4] : memref<1x512xf32, #tpu.memory_space<vmem>>, vector<1x512xf32>
    %5 = vector.broadcast %4 : vector<1x512xf32> to vector<128x512xf32>
    %6 = arith.addf %3, %5 : vector<128x512xf32>
    %7 = arith.mulf %6, %6 : vector<128x512xf32>
    %8 = arith.mulf %6, %7 : vector<128x512xf32>
    %cst_5 = arith.constant 4.471500e-02 : f32
    %9 = vector.broadcast %cst_5 : f32 to vector<128x512xf32>
    %10 = arith.mulf %9, %8 : vector<128x512xf32>
    %11 = arith.addf %6, %10 : vector<128x512xf32>
    %cst_6 = arith.constant 0.797884583 : f32
    %12 = vector.broadcast %cst_6 : f32 to vector<128x512xf32>
    %13 = arith.mulf %12, %11 : vector<128x512xf32>
    %14 = math.tanh %13 : vector<128x512xf32>
    %cst_7 = arith.constant 1.000000e+00 : f32
    %15 = vector.broadcast %cst_7 : f32 to vector<128x512xf32>
    %16 = arith.addf %15, %14 : vector<128x512xf32>
    %cst_8 = arith.constant 5.000000e-01 : f32
    %17 = vector.broadcast %cst_8 : f32 to vector<128x512xf32>
    %18 = arith.mulf %17, %16 : vector<128x512xf32>
    %19 = arith.mulf %6, %18 : vector<128x512xf32>
    %20 = arith.truncf %19 : vector<128x512xf32> to vector<128x512xbf16>
    %c0_9 = arith.constant 0 : index
    %c0_10 = arith.constant 0 : index
    %21 = vector.load %arg4[%c0_9, %c0_10] : memref<512x128xbf16, #tpu.memory_space<vmem>>, vector<512x128xbf16>
    %cst_11 = arith.constant dense<0.000000e+00> : vector<128x128xf32>
    %22 = tpu.matmul %20, %21, %cst_11 {dimension_numbers = #tpu.dot_dimension_numbers<[1], [0], [0], [1], [0, 0, 1, 1], [], []>} : vector<128x512xbf16>, vector<512x128xbf16>, vector<128x128xf32> -> vector<128x128xf32>
    %c0_12 = arith.constant 0 : index
    %c0_13 = arith.constant 0 : index
    %23 = vector.load %arg5[%c0_12, %c0_13] : memref<1x128xf32, #tpu.memory_space<vmem>>, vector<1x128xf32>
    %24 = vector.broadcast %23 : vector<1x128xf32> to vector<128x128xf32>
    %25 = arith.addf %22, %24 : vector<128x128xf32>
    %c0_14 = arith.constant 0 : index
    %c0_15 = arith.constant 0 : index
    %26 = vector.load %arg6[%c0_14, %c0_15] : memref<128x128xf32, #tpu.memory_space<vmem>>, vector<128x128xf32>
    tpu.vector_store %arg6[%c0_14, %c0_15], %25 {strides = array<i32>} : memref<128x128xf32, #tpu.memory_space<vmem>>, vector<128x128xf32>,
    return
  }
  func.func @transform_0(%arg0: i32) -> (i32, i32) {
    %c0_i32 = arith.constant 0 : i32
    %c0_i32_0 = arith.constant 0 : i32
    return %arg0, %c0_i32 : i32, i32
  }
  func.func @transform_1(%arg0: i32) -> (i32, i32) {
    %c0_i32 = arith.constant 0 : i32
    %c0_i32_0 = arith.constant 0 : i32
    %c0_i32_1 = arith.constant 0 : i32
    return %c0_i32, %c0_i32_0 : i32, i32
  }
  func.func @transform_2(%arg0: i32) -> (i32, i32) {
    %c0_i32 = arith.constant 0 : i32
    %c0_i32_0 = arith.constant 0 : i32
    %c0_i32_1 = arith.constant 0 : i32
    return %c0_i32, %c0_i32_0 : i32, i32
  }
  func.func @transform_3(%arg0: i32) -> (i32, i32) {
    %c0_i32 = arith.constant 0 : i32
    %c0_i32_0 = arith.constant 0 : i32
    %c0_i32_1 = arith.constant 0 : i32
    return %c0_i32, %c0_i32_0 : i32, i32
  }
  func.func @transform_4(%arg0: i32) -> (i32, i32) {
    %c0_i32 = arith.constant 0 : i32
    %c0_i32_0 = arith.constant 0 : i32
    %c0_i32_1 = arith.constant 0 : i32
    return %c0_i32, %c0_i32_0 : i32, i32
  }
  func.func @transform_5(%arg0: i32) -> (i32, i32) {
    %c0_i32 = arith.constant 0 : i32
    %c0_i32_0 = arith.constant 0 : i32
    return %arg0, %c0_i32 : i32, i32
  }
}

</mosaic_0001>

<llo_original>
// kernel: tpu_custom_call.1
$region0: #{tpu_custom_call.1}
  #allocation0 [shape = 'u32[]', space=smem, size = 0x4, offset = 0x4, fixed_abs, tag = 'smem constant byte address 0x4 - core index']
  #allocation1 [shape = 'u32[72,128]{1,0:T(1,128)}', space=vmem, size = 0x9000, scoped, tag = 'internal scratch']
  %s0 = inlined_call_operand.hbm [shape: f32[128,128], index: 0, kind: input, shape index: {}]
  %s1 = inlined_call_operand.hbm [shape: bf16[128,512], index: 1, kind: input, shape index: {}]
  %s2 = inlined_call_operand.hbm [shape: f32[1,512], index: 2, kind: input, shape index: {}]
  %s3 = inlined_call_operand.hbm [shape: bf16[512,128], index: 3, kind: input, shape index: {}]
  %s4 = inlined_call_operand.vmem [shape: f32[1,128], index: 4, kind: input, shape index: {}]
  %s5 = inlined_call_operand.hbm [shape: f32[128,128], index: 5, kind: output, shape index: {}]
  %s6 = sld [smem:[#allocation0]]
  $region46: #{tpu_custom_call.1} parent=0
    _
  %s8 = ssub.s32 1, %s6
  %s9 = scalar_select 0, %s8, %s6
  $region1: #{tpu_custom_call.1} parent=0
    #allocation2 [shape = 'u8[65536]{0}', space=vmem, size = 0x10000, scoped, tag = 'input window, operand 0, single buffered']
    #allocation3 [shape = 's32[1]{0}', space=sflag, size = 0x4, scoped, tag = 'scoped memory for tpu_custom_call.1']
    #allocation4 [shape = 's32[1]{0}', space=sflag, size = 0x4, scoped, tag = 'scoped memory for tpu_custom_call.1']
    #allocation5 [shape = 'u8[131072]{0}', space=vmem, size = 0x20000, scoped, tag = 'input window, operand 1, single buffered']
    #allocation6 [shape = 's32[1]{0}', space=sflag, size = 0x4, scoped, tag = 'scoped memory for tpu_custom_call.1']
    #allocation7 [shape = 'u8[2048]{0}', space=vmem, size = 0x800, scoped, tag = 'input window, operand 2, single buffered']
    #allocation8 [shape = 'u8[131072]{0}', space=vmem, size = 0x20000, scoped, tag = 'input window, operand 3, single buffered']
    #allocation9 [shape = 's32[1]{0}', space=sflag, size = 0x4, scoped, tag = 'scoped memory for tpu_custom_call.1']
    #allocation10 [shape = 'u8[65536]{0}', space=vmem, size = 0x10000, scoped, tag = 'output window, operand 0, single buffered']
    %10 = vsyncpa [#allocation3], 0
    %11 = vsyncpa [#allocation6], 0
    %12 = vsyncpa [#allocation9], 0
    %13 = vsyncpa [#allocation4], 0
    // Predicated region
    $region2: #{tpu_custom_call.1} parent=1 // pred_check
      _
    $region3: #{tpu_custom_call.1} parent=1 // pred_check_branch
      %15 = sbr.rel (0) target = $region5
    $region4: #{tpu_custom_call.1} parent=1 // pred_region
      %17 = vsyncadd [#allocation3], 0
      %s18 = sshll.u32 %s0, 4
      %s19 = int_to_ptr.hbm [resolvable:$true] %s18
      %s20 = sshll.u32 [#allocation2], 4
      %s21 = int_to_ptr.vmem [resolvable:$true] %s20
      %26 = dma.hbm_to_vmem [thread:$0]  %s19, 2048, %s21, [#allocation3], 128, 128, 8
    $region5: #{tpu_custom_call.1} parent=1 // pred_fallthru
      _
    // Predicated region
    $region6: #{tpu_custom_call.1} parent=1 // pred_check
      _
    $region7: #{tpu_custom_call.1} parent=1 // pred_check_branch
      %28 = sbr.rel (0) target = $region9
    $region8: #{tpu_custom_call.1} parent=1 // pred_region
      %30 = vsyncadd [#allocation6], 0
      %s31 = sshll.u32 %s1, 4
      %s32 = int_to_ptr.hbm [resolvable:$true] %s31
      %s33 = sshll.u32 [#allocation5], 4
      %s34 = int_to_ptr.vmem [resolvable:$true] %s33
      %39 = dma.hbm_to_vmem [thread:$0]  %s32, 4096, %s34, [#allocation6], 256, 256, 16
    $region9: #{tpu_custom_call.1} parent=1 // pred_fallthru
      _
    // Predicated region
    $region10: #{tpu_custom_call.1} parent=1 // pred_check
      _
    $region11: #{tpu_custom_call.1} parent=1 // pred_check_branch
      %41 = sbr.rel (0) target = $region13
    $region12: #{tpu_custom_call.1} parent=1 // pred_region
      %43 = vsyncadd [#allocation6], 0
      %s45 = sshll.u32 %s2, 4
      %s46 = int_to_ptr.hbm [resolvable:$true] %s45
      %s47 = sshll.u32 [#allocation7], 4
      %s48 = int_to_ptr.vmem [resolvable:$true] %s47
      %50 = dma.hbm_to_vmem [thread:$0]  %s46, 64, %s48, [#allocation6]
    $region13: #{tpu_custom_call.1} parent=1 // pred_fallthru
      _
    // Predicated region
    $region14: #{tpu_custom_call.1} parent=1 // pred_check
      _
    $region15: #{tpu_custom_call.1} parent=1 // pred_check_branch
      %52 = sbr.rel (0) target = $region17
    $region16: #{tpu_custom_call.1} parent=1 // pred_region
      %54 = vsyncadd [#allocation9], 0
      %s55 = sshll.u32 %s3, 4
      %s56 = int_to_ptr.hbm [resolvable:$true] %s55
      %s57 = sshll.u32 [#allocation8], 4
      %s58 = int_to_ptr.vmem [resolvable:$true] %s57
      %63 = dma.hbm_to_vmem [thread:$0]  %s56, 4096, %s58, [#allocation9], 64, 64, 4
    $region17: #{tpu_custom_call.1} parent=1 // pred_fallthru
      _
    // Predicated region
    $region18: #{tpu_custom_call.1} parent=1 // pred_check
      _
    $region19: #{tpu_custom_call.1} parent=1 // pred_check_branch
      %65 = sbr.rel (0) target = $region21
    $region20: #{tpu_custom_call.1} parent=1 // pred_region
      _
    $region21: #{tpu_custom_call.1} parent=1 // pred_fallthru
      _
    // Predicated region
    $region22: #{tpu_custom_call.1} parent=1 // pred_check
      _
    $region23: #{tpu_custom_call.1} parent=1 // pred_check_branch
      %67 = sbr.rel (0) target = $region25
    $region24: #{tpu_custom_call.1} parent=1 // pred_region
      %69 = dma.done [#allocation3], 2048
    $region25: #{tpu_custom_call.1} parent=1 // pred_fallthru
      _
    // Predicated region
    $region26: #{tpu_custom_call.1} parent=1 // pred_check
      _
    $region27: #{tpu_custom_call.1} parent=1 // pred_check_branch
      %71 = sbr.rel (0) target = $region29
    $region28: #{tpu_custom_call.1} parent=1 // pred_region
      %73 = dma.done [#allocation6], 4096
    $region29: #{tpu_custom_call.1} parent=1 // pred_fallthru
      _
    // Predicated region
    $region30: #{tpu_custom_call.1} parent=1 // pred_check
      _
    $region31: #{tpu_custom_call.1} parent=1 // pred_check_branch
      %75 = sbr.rel (0) target = $region33
    $region32: #{tpu_custom_call.1} parent=1 // pred_region
      %77 = dma.done [#allocation6], 64
    $region33: #{tpu_custom_call.1} parent=1 // pred_fallthru
      _
    // Predicated region
    $region34: #{tpu_custom_call.1} parent=1 // pred_check
      _
    $region35: #{tpu_custom_call.1} parent=1 // pred_check_branch
      %79 = sbr.rel (0) target = $region37
    $region36: #{tpu_custom_call.1} parent=1 // pred_region
      %81 = dma.done [#allocation9], 4096
    $region37: #{tpu_custom_call.1} parent=1 // pred_fallthru
      _
    %v82 = vld [vmem:[#allocation2] sm:$0xff]
    %v83 = vld [vmem:[#allocation2 + $0x8] sm:$0xff]
    %v84 = vld [vmem:[#allocation2 + $0x10] sm:$0xff]
    %v85 = vld [vmem:[#allocation2 + $0x18] sm:$0xff]
    %v86 = vld [vmem:[#allocation2 + $0x20] sm:$0xff]
    %v87 = vld [vmem:[#allocation2 + $0x28] sm:$0xff]
    %v88 = vld [vmem:[#allocation2 + $0x30] sm:$0xff]
    %v89 = vld [vmem:[#allocation2 + $0x38] sm:$0xff]
    %v90 = vld [vmem:[#allocation2 + $0x40] sm:$0xff]
    %v91 = vld [vmem:[#allocation2 + $0x48] sm:$0xff]
    %v92 = vld [vmem:[#allocation2 + $0x50] sm:$0xff]
    %v93 = vld [vmem:[#allocation2 + $0x58] sm:$0xff]
    %v94 = vld [vmem:[#allocation2 + $0x60] sm:$0xff]
    %v95 = vld [vmem:[#allocation2 + $0x68] sm:$0xff]
    %v96 = vld [vmem:[#allocation2 + $0x70] sm:$0xff]
    %v97 = vld [vmem:[#allocation2 + $0x78] sm:$0xff]
    %v98 = vpack.c.bf16 %v83, %v82
    %v99 = vpack.c.bf16 %v85, %v84
    %v100 = vpack.c.bf16 %v87, %v86
    %v101 = vpack.c.bf16 %v89, %v88
    %v102 = vpack.c.bf16 %v91, %v90
    %v103 = vpack.c.bf16 %v93, %v92
    %v104 = vpack.c.bf16 %v95, %v94
    %v105 = vpack.c.bf16 %v97, %v96
    %v106 = vld [vmem:[#allocation5] sm:$0xff]
    %v107 = vld [vmem:[#allocation5 + $0x8] sm:$0xff]
    %v108 = vld [vmem:[#allocation5 + $0x10] sm:$0xff]
    %v109 = vld [vmem:[#allocation5 + $0x18] sm:$0xff]
    %v110 = vld [vmem:[#allocation5 + $0x20] sm:$0xff]
    %v111 = vld [vmem:[#allocation5 + $0x28] sm:$0xff]
    %v112 = vld [vmem:[#allocation5 + $0x30] sm:$0xff]
    %v113 = vld [vmem:[#allocation5 + $0x38] sm:$0xff]
    %v114 = vld [vmem:[#allocation5 + $0x40] sm:$0xff]
    %v115 = vld [vmem:[#allocation5 + $0x48] sm:$0xff]
    %v116 = vld [vmem:[#allocation5 + $0x50] sm:$0xff]
    %v117 = vld [vmem:[#allocation5 + $0x58] sm:$0xff]
    %v118 = vld [vmem:[#allocation5 + $0x60] sm:$0xff]
    %v119 = vld [vmem:[#allocation5 + $0x68] sm:$0xff]
    %v120 = vld [vmem:[#allocation5 + $0x70] sm:$0xff]
    %v121 = vld [vmem:[#allocation5 + $0x78] sm:$0xff]
    %v122 = vld [vmem:[#allocation5 + $0x80] sm:$0xff]
    %v123 = vld [vmem:[#allocation5 + $0x88] sm:$0xff]
    %v124 = vld [vmem:[#allocation5 + $0x90] sm:$0xff]
    %v125 = vld [vmem:[#allocation5 + $0x98] sm:$0xff]
    %v126 = vld [vmem:[#allocation5 + $0xa0] sm:$0xff]
    %v127 = vld [vmem:[#allocation5 + $0xa8] sm:$0xff]
    %v128 = vld [vmem:[#allocation5 + $0xb0] sm:$0xff]
    %v129 = vld [vmem:[#allocation5 + $0xb8] sm:$0xff]
    %v130 = vld [vmem:[#allocation5 + $0xc0] sm:$0xff]
    %v131 = vld [vmem:[#allocation5 + $0xc8] sm:$0xff]
    %v132 = vld [vmem:[#allocation5 + $0xd0] sm:$0xff]
    %v133 = vld [vmem:[#allocation5 + $0xd8] sm:$0xff]
    %v134 = vld [vmem:[#allocation5 + $0xe0] sm:$0xff]
    %v135 = vld [vmem:[#allocation5 + $0xe8] sm:$0xff]
    %v136 = vld [vmem:[#allocation5 + $0xf0] sm:$0xff]
    %v137 = vld [vmem:[#allocation5 + $0xf8] sm:$0xff]
    %v138 = vld [vmem:[#allocation7] sm:$0xf]
    %v140 = vperm.slane %v138, 0
    %v141 = vperm.slane %v138, 1
    %v142 = vperm.slane %v138, 2
    %v143 = vperm.slane %v138, 3
    %v180 = vunpack.c.l.b16 %v106
    %v181 = vunpack.c.h.b16 %v106
    %v182 = vunpack.c.l.b16 %v107
    %v183 = vunpack.c.h.b16 %v107
    %v184 = vunpack.c.l.b16 %v108
    %v185 = vunpack.c.h.b16 %v108
    %v186 = vunpack.c.l.b16 %v109
    %v187 = vunpack.c.h.b16 %v109
    %v188 = vunpack.c.l.b16 %v110
    %v189 = vunpack.c.h.b16 %v110
    %v190 = vunpack.c.l.b16 %v111
    %v191 = vunpack.c.h.b16 %v111
    %v192 = vunpack.c.l.b16 %v112
    %v193 = vunpack.c.h.b16 %v112
    %v194 = vunpack.c.l.b16 %v113
    %v195 = vunpack.c.h.b16 %v113
    %v196 = vunpack.c.l.b16 %v114
    %v197 = vunpack.c.h.b16 %v114
    %v198 = vunpack.c.l.b16 %v115
    %v199 = vunpack.c.h.b16 %v115
    %v200 = vunpack.c.l.b16 %v116
    %v201 = vunpack.c.h.b16 %v116
    %v202 = vunpack.c.l.b16 %v117
    %v203 = vunpack.c.h.b16 %v117
    %v204 = vunpack.c.l.b16 %v118
    %v205 = vunpack.c.h.b16 %v118
    %v206 = vunpack.c.l.b16 %v119
    %v207 = vunpack.c.h.b16 %v119
    %v208 = vunpack.c.l.b16 %v120
    %v209 = vunpack.c.h.b16 %v120
    %v210 = vunpack.c.l.b16 %v121
    %v211 = vunpack.c.h.b16 %v121
    %v212 = vunpack.c.l.b16 %v122
    %v213 = vunpack.c.h.b16 %v122
    %v214 = vunpack.c.l.b16 %v123
    %v215 = vunpack.c.h.b16 %v123
    %v216 = vunpack.c.l.b16 %v124
    %v217 = vunpack.c.h.b16 %v124
    %v218 = vunpack.c.l.b16 %v125
    %v219 = vunpack.c.h.b16 %v125
    %v220 = vunpack.c.l.b16 %v126
    %v221 = vunpack.c.h.b16 %v126
    %v222 = vunpack.c.l.b16 %v127
    %v223 = vunpack.c.h.b16 %v127
    %v224 = vunpack.c.l.b16 %v128
    %v225 = vunpack.c.h.b16 %v128
    %v226 = vunpack.c.l.b16 %v129
    %v227 = vunpack.c.h.b16 %v129
    %v228 = vunpack.c.l.b16 %v130
    %v229 = vunpack.c.h.b16 %v130
    %v230 = vunpack.c.l.b16 %v131
    %v231 = vunpack.c.h.b16 %v131
    %v232 = vunpack.c.l.b16 %v132
    %v233 = vunpack.c.h.b16 %v132
    %v234 = vunpack.c.l.b16 %v133
    %v235 = vunpack.c.h.b16 %v133
    %v236 = vunpack.c.l.b16 %v134
    %v237 = vunpack.c.h.b16 %v134
    %v238 = vunpack.c.l.b16 %v135
    %v239 = vunpack.c.h.b16 %v135
    %v240 = vunpack.c.l.b16 %v136
    %v241 = vunpack.c.h.b16 %v136
    %v242 = vunpack.c.l.b16 %v137
    %v243 = vunpack.c.h.b16 %v137
    %v244 = vpack.c.b16 %v184, %v180
    %v245 = vpack.c.b16 %v185, %v181
    %v246 = vpack.c.b16 %v186, %v182
    %v247 = vpack.c.b16 %v187, %v183
    %v248 = vpack.c.b16 %v192, %v188
    %v249 = vpack.c.b16 %v193, %v189
    %v250 = vpack.c.b16 %v194, %v190
    %v251 = vpack.c.b16 %v195, %v191
    %v252 = vpack.c.b16 %v200, %v196
    %v253 = vpack.c.b16 %v201, %v197
    %v254 = vpack.c.b16 %v202, %v198
    %v255 = vpack.c.b16 %v203, %v199
    %v256 = vpack.c.b16 %v208, %v204
    %v257 = vpack.c.b16 %v209, %v205
    %v258 = vpack.c.b16 %v210, %v206
    %v259 = vpack.c.b16 %v211, %v207
    %v260 = vpack.c.b16 %v216, %v212
    %v261 = vpack.c.b16 %v217, %v213
    %v262 = vpack.c.b16 %v218, %v214
    %v263 = vpack.c.b16 %v219, %v215
    %v264 = vpack.c.b16 %v224, %v220
    %v265 = vpack.c.b16 %v225, %v221
    %v266 = vpack.c.b16 %v226, %v222
    %v267 = vpack.c.b16 %v227, %v223
    %v268 = vpack.c.b16 %v232, %v228
    %v269 = vpack.c.b16 %v233, %v229
    %v270 = vpack.c.b16 %v234, %v230
    %v271 = vpack.c.b16 %v235, %v231
    %v272 = vpack.c.b16 %v240, %v236
    %v273 = vpack.c.b16 %v241, %v237
    %v274 = vpack.c.b16 %v242, %v238
    %v275 = vpack.c.b16 %v243, %v239
    %308 = vmatpush.bf16.msra.mxu0 %v272
    %309 = vmatpush.bf16.msra.mxu0 %v268
    %310 = vmatpush.bf16.msra.mxu0 %v264
    %311 = vmatpush.bf16.msra.mxu0 %v260
    %312 = vmatpush.bf16.msra.mxu0 %v256
    %313 = vmatpush.bf16.msra.mxu0 %v252
    %314 = vmatpush.bf16.msra.mxu0 %v248
    %315 = vmatpush.bf16.msra.mxu0 %v244
    %316 = vmatmul.bf16.gmra.mxu0 %v98
    %v317 = vpop.f32.mrf.mxu0
    %v318 = vadd.f32 %v140, %v317
    %v319 = vpop.f32.mrf.mxu0
    %v320 = vadd.f32 %v140, %v319
    %321 = vmatmul.bf16.gmra.mxu0 %v99
    %v322 = vpop.f32.mrf.mxu0
    %v323 = vadd.f32 %v140, %v322
    %v324 = vpop.f32.mrf.mxu0
    %v325 = vadd.f32 %v140, %v324
    %326 = vmatmul.bf16.gmra.mxu0 %v100
    %v327 = vpop.f32.mrf.mxu0
    %v328 = vadd.f32 %v140, %v327
    %v329 = vpop.f32.mrf.mxu0
    %v330 = vadd.f32 %v140, %v329
    %331 = vmatmul.bf16.gmra.mxu0 %v101
    %v332 = vpop.f32.mrf.mxu0
    %v333 = vadd.f32 %v140, %v332
    %v334 = vpop.f32.mrf.mxu0
    %v335 = vadd.f32 %v140, %v334
    %336 = vmatmul.bf16.gmra.mxu0 %v102
    %v337 = vpop.f32.mrf.mxu0
    %v338 = vadd.f32 %v140, %v337
    %v339 = vpop.f32.mrf.mxu0
    %v340 = vadd.f32 %v140, %v339
    %341 = vmatmul.bf16.gmra.mxu0 %v103
    %v342 = vpop.f32.mrf.mxu0
    %v343 = vadd.f32 %v140, %v342
    %v344 = vpop.f32.mrf.mxu0
    %v345 = vadd.f32 %v140, %v344
    %346 = vmatmul.bf16.gmra.mxu0 %v104
    %v347 = vpop.f32.mrf.mxu0
    %v348 = vadd.f32 %v140, %v347
    %v349 = vpop.f32.mrf.mxu0
    %v350 = vadd.f32 %v140, %v349
    %351 = vmatmul.bf16.gmra.mxu0 %v105
    %v352 = vpop.f32.mrf.mxu0
    %v353 = vadd.f32 %v140, %v352
    %v354 = vpop.f32.mrf.mxu0
    %v355 = vadd.f32 %v140, %v354
    %356 = vdwg.mxu0
    %357 = vmatpush.bf16.msra.mxu0 %v273
    %358 = vmatpush.bf16.msra.mxu0 %v269
    %359 = vmatpush.bf16.msra.mxu0 %v265
    %360 = vmatpush.bf16.msra.mxu0 %v261
    %361 = vmatpush.bf16.msra.mxu0 %v257
    %362 = vmatpush.bf16.msra.mxu0 %v253
    %363 = vmatpush.bf16.msra.mxu0 %v249
    %364 = vmatpush.bf16.msra.mxu0 %v245
    %365 = vmatmul.bf16.gmra.mxu0 %v98
    %v366 = vpop.f32.mrf.mxu0
    %v367 = vadd.f32 %v141, %v366
    %v368 = vpop.f32.mrf.mxu0
    %v369 = vadd.f32 %v141, %v368
    %370 = vmatmul.bf16.gmra.mxu0 %v99
    %v371 = vpop.f32.mrf.mxu0
    %v372 = vadd.f32 %v141, %v371
    %v373 = vpop.f32.mrf.mxu0
    %v374 = vadd.f32 %v141, %v373
    %375 = vmatmul.bf16.gmra.mxu0 %v100
    %v376 = vpop.f32.mrf.mxu0
    %v377 = vadd.f32 %v141, %v376
    %v378 = vpop.f32.mrf.mxu0
    %v379 = vadd.f32 %v141, %v378
    %380 = vmatmul.bf16.gmra.mxu0 %v101
    %v381 = vpop.f32.mrf.mxu0
    %v382 = vadd.f32 %v141, %v381
    %v383 = vpop.f32.mrf.mxu0
    %v384 = vadd.f32 %v141, %v383
    %385 = vmatmul.bf16.gmra.mxu0 %v102
    %v386 = vpop.f32.mrf.mxu0
    %v387 = vadd.f32 %v141, %v386
    %v388 = vpop.f32.mrf.mxu0
    %v389 = vadd.f32 %v141, %v388
    %390 = vmatmul.bf16.gmra.mxu0 %v103
    %v391 = vpop.f32.mrf.mxu0
    %v392 = vadd.f32 %v141, %v391
    %v393 = vpop.f32.mrf.mxu0
    %v394 = vadd.f32 %v141, %v393
    %395 = vmatmul.bf16.gmra.mxu0 %v104
    %v396 = vpop.f32.mrf.mxu0
    %v397 = vadd.f32 %v141, %v396
    %v398 = vpop.f32.mrf.mxu0
    %v399 = vadd.f32 %v141, %v398
    %400 = vmatmul.bf16.gmra.mxu0 %v105
    %v401 = vpop.f32.mrf.mxu0
    %v402 = vadd.f32 %v141, %v401
    %v403 = vpop.f32.mrf.mxu0
    %v404 = vadd.f32 %v141, %v403
    %405 = vdwg.mxu0
    %406 = vmatpush.bf16.msra.mxu0 %v274
    %407 = vmatpush.bf16.msra.mxu0 %v270
    %408 = vmatpush.bf16.msra.mxu0 %v266
    %409 = vmatpush.bf16.msra.mxu0 %v262
    %410 = vmatpush.bf16.msra.mxu0 %v258
    %411 = vmatpush.bf16.msra.mxu0 %v254
    %412 = vmatpush.bf16.msra.mxu0 %v250
    %413 = vmatpush.bf16.msra.mxu0 %v246
    %414 = vmatmul.bf16.gmra.mxu0 %v98
    %v415 = vpop.f32.mrf.mxu0
    %v416 = vadd.f32 %v142, %v415
    %v417 = vpop.f32.mrf.mxu0
    %v418 = vadd.f32 %v142, %v417
    %419 = vmatmul.bf16.gmra.mxu0 %v99
    %v420 = vpop.f32.mrf.mxu0
    %v421 = vadd.f32 %v142, %v420
    %v422 = vpop.f32.mrf.mxu0
    %v423 = vadd.f32 %v142, %v422
    %424 = vmatmul.bf16.gmra.mxu0 %v100
    %v425 = vpop.f32.mrf.mxu0
    %v426 = vadd.f32 %v142, %v425
    %v427 = vpop.f32.mrf.mxu0
    %v428 = vadd.f32 %v142, %v427
    %429 = vmatmul.bf16.gmra.mxu0 %v101
    %v430 = vpop.f32.mrf.mxu0
    %v431 = vadd.f32 %v142, %v430
    %v432 = vpop.f32.mrf.mxu0
    %v433 = vadd.f32 %v142, %v432
    %434 = vmatmul.bf16.gmra.mxu0 %v102
    %v435 = vpop.f32.mrf.mxu0
    %v436 = vadd.f32 %v142, %v435
    %v437 = vpop.f32.mrf.mxu0
    %v438 = vadd.f32 %v142, %v437
    %439 = vmatmul.bf16.gmra.mxu0 %v103
    %v440 = vpop.f32.mrf.mxu0
    %v441 = vadd.f32 %v142, %v440
    %v442 = vpop.f32.mrf.mxu0
    %v443 = vadd.f32 %v142, %v442
    %444 = vmatmul.bf16.gmra.mxu0 %v104
    %v445 = vpop.f32.mrf.mxu0
    %v446 = vadd.f32 %v142, %v445
    %v447 = vpop.f32.mrf.mxu0
    %v448 = vadd.f32 %v142, %v447
    %449 = vmatmul.bf16.gmra.mxu0 %v105
    %v450 = vpop.f32.mrf.mxu0
    %v451 = vadd.f32 %v142, %v450
    %v452 = vpop.f32.mrf.mxu0
    %v453 = vadd.f32 %v142, %v452
    %454 = vdwg.mxu0
    %455 = vmatpush.bf16.msra.mxu0 %v275
    %456 = vmatpush.bf16.msra.mxu0 %v271
    %457 = vmatpush.bf16.msra.mxu0 %v267
    %458 = vmatpush.bf16.msra.mxu0 %v263
    %459 = vmatpush.bf16.msra.mxu0 %v259
    %460 = vmatpush.bf16.msra.mxu0 %v255
    %461 = vmatpush.bf16.msra.mxu0 %v251
    %462 = vmatpush.bf16.msra.mxu0 %v247
    %463 = vmatmul.bf16.gmra.mxu0 %v98
    %v464 = vpop.f32.mrf.mxu0
    %v465 = vadd.f32 %v143, %v464
    %v466 = vpop.f32.mrf.mxu0
    %v467 = vadd.f32 %v143, %v466
    %468 = vmatmul.bf16.gmra.mxu0 %v99
    %v469 = vpop.f32.mrf.mxu0
    %v470 = vadd.f32 %v143, %v469
    %v471 = vpop.f32.mrf.mxu0
    %v472 = vadd.f32 %v143, %v471
    %473 = vmatmul.bf16.gmra.mxu0 %v100
    %v474 = vpop.f32.mrf.mxu0
    %v475 = vadd.f32 %v143, %v474
    %v476 = vpop.f32.mrf.mxu0
    %v477 = vadd.f32 %v143, %v476
    %478 = vmatmul.bf16.gmra.mxu0 %v101
    %v479 = vpop.f32.mrf.mxu0
    %v480 = vadd.f32 %v143, %v479
    %v481 = vpop.f32.mrf.mxu0
    %v482 = vadd.f32 %v143, %v481
    %483 = vmatmul.bf16.gmra.mxu0 %v102
    %v484 = vpop.f32.mrf.mxu0
    %v485 = vadd.f32 %v143, %v484
    %v486 = vpop.f32.mrf.mxu0
    %v487 = vadd.f32 %v143, %v486
    %488 = vmatmul.bf16.gmra.mxu0 %v103
    %v489 = vpop.f32.mrf.mxu0
    %v490 = vadd.f32 %v143, %v489
    %v491 = vpop.f32.mrf.mxu0
    %v492 = vadd.f32 %v143, %v491
    %493 = vmatmul.bf16.gmra.mxu0 %v104
    %v494 = vpop.f32.mrf.mxu0
    %v495 = vadd.f32 %v143, %v494
    %v496 = vpop.f32.mrf.mxu0
    %v497 = vadd.f32 %v143, %v496
    %498 = vmatmul.bf16.gmra.mxu0 %v105
    %v499 = vpop.f32.mrf.mxu0
    %v500 = vadd.f32 %v143, %v499
    %v501 = vpop.f32.mrf.mxu0
    %v502 = vadd.f32 %v143, %v501
    %503 = vdwg.mxu0
    %v504 = vmul.f32 %v318, %v318
    %v505 = vmul.f32 %v367, %v367
    %v506 = vmul.f32 %v416, %v416
    %v507 = vmul.f32 %v465, %v465
    %v508 = vmul.f32 %v320, %v320
    %v509 = vmul.f32 %v369, %v369
    %v510 = vmul.f32 %v418, %v418
    %v511 = vmul.f32 %v467, %v467
    %v512 = vmul.f32 %v323, %v323
    %v513 = vmul.f32 %v372, %v372
    %v514 = vmul.f32 %v421, %v421
    %v515 = vmul.f32 %v470, %v470
    %v516 = vmul.f32 %v325, %v325
    %v517 = vmul.f32 %v374, %v374
    %v518 = vmul.f32 %v423, %v423
    %v519 = vmul.f32 %v472, %v472
    %v520 = vmul.f32 %v328, %v328
    %v521 = vmul.f32 %v377, %v377
    %v522 = vmul.f32 %v426, %v426
    %v523 = vmul.f32 %v475, %v475
    %v524 = vmul.f32 %v330, %v330
    %v525 = vmul.f32 %v379, %v379
    %v526 = vmul.f32 %v428, %v428
    %v527 = vmul.f32 %v477, %v477
    %v528 = vmul.f32 %v333, %v333
    %v529 = vmul.f32 %v382, %v382
    %v530 = vmul.f32 %v431, %v431
    %v531 = vmul.f32 %v480, %v480
    %v532 = vmul.f32 %v335, %v335
    %v533 = vmul.f32 %v384, %v384
    %v534 = vmul.f32 %v433, %v433
    %v535 = vmul.f32 %v482, %v482
    %v536 = vmul.f32 %v338, %v338
    %v537 = vmul.f32 %v387, %v387
    %v538 = vmul.f32 %v436, %v436
    %v539 = vmul.f32 %v485, %v485
    %v540 = vmul.f32 %v340, %v340
    %v541 = vmul.f32 %v389, %v389
    %v542 = vmul.f32 %v438, %v438
    %v543 = vmul.f32 %v487, %v487
    %v544 = vmul.f32 %v343, %v343
    %v545 = vmul.f32 %v392, %v392
    %v546 = vmul.f32 %v441, %v441
    %v547 = vmul.f32 %v490, %v490
    %v548 = vmul.f32 %v345, %v345
    %v549 = vmul.f32 %v394, %v394
    %v550 = vmul.f32 %v443, %v443
    %v551 = vmul.f32 %v492, %v492
    %v552 = vmul.f32 %v348, %v348
    %v553 = vmul.f32 %v397, %v397
    %v554 = vmul.f32 %v446, %v446
    %v555 = vmul.f32 %v495, %v495
    %v556 = vmul.f32 %v350, %v350
    %v557 = vmul.f32 %v399, %v399
    %v558 = vmul.f32 %v448, %v448
    %v559 = vmul.f32 %v497, %v497
    %v560 = vmul.f32 %v353, %v353
    %v561 = vmul.f32 %v402, %v402
    %v562 = vmul.f32 %v451, %v451
    %v563 = vmul.f32 %v500, %v500
    %v564 = vmul.f32 %v355, %v355
    %v565 = vmul.f32 %v404, %v404
    %v566 = vmul.f32 %v453, %v453
    %v567 = vmul.f32 %v502, %v502
    %v568 = vmul.f32 %v318, %v504
    %v569 = vmul.f32 %v367, %v505
    %v570 = vmul.f32 %v416, %v506
    %v571 = vmul.f32 %v465, %v507
    %v572 = vmul.f32 %v320, %v508
    %v573 = vmul.f32 %v369, %v509
    %v574 = vmul.f32 %v418, %v510
    %v575 = vmul.f32 %v467, %v511
    %v576 = vmul.f32 %v323, %v512
    %v577 = vmul.f32 %v372, %v513
    %v578 = vmul.f32 %v421, %v514
    %v579 = vmul.f32 %v470, %v515
    %v580 = vmul.f32 %v325, %v516
    %v581 = vmul.f32 %v374, %v517
    %v582 = vmul.f32 %v423, %v518
    %v583 = vmul.f32 %v472, %v519
    %v584 = vmul.f32 %v328, %v520
    %v585 = vmul.f32 %v377, %v521
    %v586 = vmul.f32 %v426, %v522
    %v587 = vmul.f32 %v475, %v523
    %v588 = vmul.f32 %v330, %v524
    %v589 = vmul.f32 %v379, %v525
    %v590 = vmul.f32 %v428, %v526
    %v591 = vmul.f32 %v477, %v527
    %v592 = vmul.f32 %v333, %v528
    %v593 = vmul.f32 %v382, %v529
    %v594 = vmul.f32 %v431, %v530
    %v595 = vmul.f32 %v480, %v531
    %v596 = vmul.f32 %v335, %v532
    %v597 = vmul.f32 %v384, %v533
    %v598 = vmul.f32 %v433, %v534
    %v599 = vmul.f32 %v482, %v535
    %v600 = vmul.f32 %v338, %v536
    %v601 = vmul.f32 %v387, %v537
    %v602 = vmul.f32 %v436, %v538
    %v603 = vmul.f32 %v485, %v539
    %v604 = vmul.f32 %v340, %v540
    %v605 = vmul.f32 %v389, %v541
    %v606 = vmul.f32 %v438, %v542
    %v607 = vmul.f32 %v487, %v543
    %v608 = vmul.f32 %v343, %v544
    %v609 = vmul.f32 %v392, %v545
    %v610 = vmul.f32 %v441, %v546
    %v611 = vmul.f32 %v490, %v547
    %v612 = vmul.f32 %v345, %v548
    %v613 = vmul.f32 %v394, %v549
    %v614 = vmul.f32 %v443, %v550
    %v615 = vmul.f32 %v492, %v551
    %v616 = vmul.f32 %v348, %v552
    %v617 = vmul.f32 %v397, %v553
    %v618 = vmul.f32 %v446, %v554
    %v619 = vmul.f32 %v495, %v555
    %v620 = vmul.f32 %v350, %v556
    %v621 = vmul.f32 %v399, %v557
    %v622 = vmul.f32 %v448, %v558
    %v623 = vmul.f32 %v497, %v559
    %v624 = vmul.f32 %v353, %v560
    %v625 = vmul.f32 %v402, %v561
    %v626 = vmul.f32 %v451, %v562
    %v627 = vmul.f32 %v500, %v563
    %v628 = vmul.f32 %v355, %v564
    %v629 = vmul.f32 %v404, %v565
    %v630 = vmul.f32 %v453, %v566
    %v631 = vmul.f32 %v502, %v567
    %v632 = vmul.f32 %v568, 0.044715
    %v633 = vmul.f32 %v569, 0.044715
    %v634 = vmul.f32 %v570, 0.044715
    %v635 = vmul.f32 %v571, 0.044715
    %v636 = vmul.f32 %v572, 0.044715
    %v637 = vmul.f32 %v573, 0.044715
    %v638 = vmul.f32 %v574, 0.044715
    %v639 = vmul.f32 %v575, 0.044715
    %v640 = vmul.f32 %v576, 0.044715
    %v641 = vmul.f32 %v577, 0.044715
    %v642 = vmul.f32 %v578, 0.044715
    %v643 = vmul.f32 %v579, 0.044715
    %v644 = vmul.f32 %v580, 0.044715
    %v645 = vmul.f32 %v581, 0.044715
    %v646 = vmul.f32 %v582, 0.044715
    %v647 = vmul.f32 %v583, 0.044715
    %v648 = vmul.f32 %v584, 0.044715
    %v649 = vmul.f32 %v585, 0.044715
    %v650 = vmul.f32 %v586, 0.044715
    %v651 = vmul.f32 %v587, 0.044715
    %v652 = vmul.f32 %v588, 0.044715
    %v653 = vmul.f32 %v589, 0.044715
    %v654 = vmul.f32 %v590, 0.044715
    %v655 = vmul.f32 %v591, 0.044715
    %v656 = vmul.f32 %v592, 0.044715
    %v657 = vmul.f32 %v593, 0.044715
    %v658 = vmul.f32 %v594, 0.044715
    %v659 = vmul.f32 %v595, 0.044715
    %v660 = vmul.f32 %v596, 0.044715
    %v661 = vmul.f32 %v597, 0.044715
    %v662 = vmul.f32 %v598, 0.044715
    %v663 = vmul.f32 %v599, 0.044715
    %v664 = vmul.f32 %v600, 0.044715
    %v665 = vmul.f32 %v601, 0.044715
    %v666 = vmul.f32 %v602, 0.044715
    %v667 = vmul.f32 %v603, 0.044715
    %v668 = vmul.f32 %v604, 0.044715
    %v669 = vmul.f32 %v605, 0.044715
    %v670 = vmul.f32 %v606, 0.044715
    %v671 = vmul.f32 %v607, 0.044715
    %v672 = vmul.f32 %v608, 0.044715
    %v673 = vmul.f32 %v609, 0.044715
    %v674 = vmul.f32 %v610, 0.044715
    %v675 = vmul.f32 %v611, 0.044715
    %v676 = vmul.f32 %v612, 0.044715
    %v677 = vmul.f32 %v613, 0.044715
    %v678 = vmul.f32 %v614, 0.044715
    %v679 = vmul.f32 %v615, 0.044715
    %v680 = vmul.f32 %v616, 0.044715
    %v681 = vmul.f32 %v617, 0.044715
    %v682 = vmul.f32 %v618, 0.044715
    %v683 = vmul.f32 %v619, 0.044715
    %v684 = vmul.f32 %v620, 0.044715
    %v685 = vmul.f32 %v621, 0.044715
    %v686 = vmul.f32 %v622, 0.044715
    %v687 = vmul.f32 %v623, 0.044715
    %v688 = vmul.f32 %v624, 0.044715
    %v689 = vmul.f32 %v625, 0.044715
    %v690 = vmul.f32 %v626, 0.044715
    %v691 = vmul.f32 %v627, 0.044715
    %v692 = vmul.f32 %v628, 0.044715
    %v693 = vmul.f32 %v629, 0.044715
    %v694 = vmul.f32 %v630, 0.044715
    %v695 = vmul.f32 %v631, 0.044715
    %v696 = vadd.f32 %v318, %v632
    %v697 = vadd.f32 %v367, %v633
    %v698 = vadd.f32 %v416, %v634
    %v699 = vadd.f32 %v465, %v635
    %v700 = vadd.f32 %v320, %v636
    %v701 = vadd.f32 %v369, %v637
    %v702 = vadd.f32 %v418, %v638
    %v703 = vadd.f32 %v467, %v639
    %v704 = vadd.f32 %v323, %v640
    %v705 = vadd.f32 %v372, %v641
    %v706 = vadd.f32 %v421, %v642
    %v707 = vadd.f32 %v470, %v643
    %v708 = vadd.f32 %v325, %v644
    %v709 = vadd.f32 %v374, %v645
    %v710 = vadd.f32 %v423, %v646
    %v711 = vadd.f32 %v472, %v647
    %v712 = vadd.f32 %v328, %v648
    %v713 = vadd.f32 %v377, %v649
    %v714 = vadd.f32 %v426, %v650
    %v715 = vadd.f32 %v475, %v651
    %v716 = vadd.f32 %v330, %v652
    %v717 = vadd.f32 %v379, %v653
    %v718 = vadd.f32 %v428, %v654
    %v719 = vadd.f32 %v477, %v655
    %v720 = vadd.f32 %v333, %v656
    %v721 = vadd.f32 %v382, %v657
    %v722 = vadd.f32 %v431, %v658
    %v723 = vadd.f32 %v480, %v659
    %v724 = vadd.f32 %v335, %v660
    %v725 = vadd.f32 %v384, %v661
    %v726 = vadd.f32 %v433, %v662
    %v727 = vadd.f32 %v482, %v663
    %v728 = vadd.f32 %v338, %v664
    %v729 = vadd.f32 %v387, %v665
    %v730 = vadd.f32 %v436, %v666
    %v731 = vadd.f32 %v485, %v667
    %v732 = vadd.f32 %v340, %v668
    %v733 = vadd.f32 %v389, %v669
    %v734 = vadd.f32 %v438, %v670
    %v735 = vadd.f32 %v487, %v671
    %v736 = vadd.f32 %v343, %v672
    %v737 = vadd.f32 %v392, %v673
    %v738 = vadd.f32 %v441, %v674
    %v739 = vadd.f32 %v490, %v675
    %v740 = vadd.f32 %v345, %v676
    %v741 = vadd.f32 %v394, %v677
    %v742 = vadd.f32 %v443, %v678
    %v743 = vadd.f32 %v492, %v679
    %v744 = vadd.f32 %v348, %v680
    %v745 = vadd.f32 %v397, %v681
    %v746 = vadd.f32 %v446, %v682
    %v747 = vadd.f32 %v495, %v683
    %v748 = vadd.f32 %v350, %v684
    %v749 = vadd.f32 %v399, %v685
    %v750 = vadd.f32 %v448, %v686
    %v751 = vadd.f32 %v497, %v687
    %v752 = vadd.f32 %v353, %v688
    %v753 = vadd.f32 %v402, %v689
    %v754 = vadd.f32 %v451, %v690
    %v755 = vadd.f32 %v500, %v691
    %v756 = vadd.f32 %v355, %v692
    %v757 = vadd.f32 %v404, %v693
    %v758 = vadd.f32 %v453, %v694
    %v759 = vadd.f32 %v502, %v695
    %v760 = vmul.f32 %v696, 0.7978846
    %v761 = vmul.f32 %v697, 0.7978846
    %v762 = vmul.f32 %v698, 0.7978846
    %v763 = vmul.f32 %v699, 0.7978846
    %v764 = vmul.f32 %v700, 0.7978846
    %v765 = vmul.f32 %v701, 0.7978846
    %v766 = vmul.f32 %v702, 0.7978846
    %v767 = vmul.f32 %v703, 0.7978846
    %v768 = vmul.f32 %v704, 0.7978846
    %v769 = vmul.f32 %v705, 0.7978846
    %v770 = vmul.f32 %v706, 0.7978846
    %v771 = vmul.f32 %v707, 0.7978846
    %v772 = vmul.f32 %v708, 0.7978846
    %v773 = vmul.f32 %v709, 0.7978846
    %v774 = vmul.f32 %v710, 0.7978846
    %v775 = vmul.f32 %v711, 0.7978846
    %v776 = vmul.f32 %v712, 0.7978846
    %v777 = vmul.f32 %v713, 0.7978846
    %v778 = vmul.f32 %v714, 0.7978846
    %v779 = vmul.f32 %v715, 0.7978846
    %v780 = vmul.f32 %v716, 0.7978846
    %v781 = vmul.f32 %v717, 0.7978846
    %v782 = vmul.f32 %v718, 0.7978846
    %v783 = vmul.f32 %v719, 0.7978846
    %v784 = vmul.f32 %v720, 0.7978846
    %v785 = vmul.f32 %v721, 0.7978846
    %v786 = vmul.f32 %v722, 0.7978846
    %v787 = vmul.f32 %v723, 0.7978846
    %v788 = vmul.f32 %v724, 0.7978846
    %v789 = vmul.f32 %v725, 0.7978846
    %v790 = vmul.f32 %v726, 0.7978846
    %v791 = vmul.f32 %v727, 0.7978846
    %v792 = vmul.f32 %v728, 0.7978846
    %v793 = vmul.f32 %v729, 0.7978846
    %v794 = vmul.f32 %v730, 0.7978846
    %v795 = vmul.f32 %v731, 0.7978846
    %v796 = vmul.f32 %v732, 0.7978846
    %v797 = vmul.f32 %v733, 0.7978846
    %v798 = vmul.f32 %v734, 0.7978846
    %v799 = vmul.f32 %v735, 0.7978846
    %v800 = vmul.f32 %v736, 0.7978846
    %v801 = vmul.f32 %v737, 0.7978846
    %v802 = vmul.f32 %v738, 0.7978846
    %v803 = vmul.f32 %v739, 0.7978846
    %v804 = vmul.f32 %v740, 0.7978846
    %v805 = vmul.f32 %v741, 0.7978846
    %v806 = vmul.f32 %v742, 0.7978846
    %v807 = vmul.f32 %v743, 0.7978846
    %v808 = vmul.f32 %v744, 0.7978846
    %v809 = vmul.f32 %v745, 0.7978846
    %v810 = vmul.f32 %v746, 0.7978846
    %v811 = vmul.f32 %v747, 0.7978846
    %v812 = vmul.f32 %v748, 0.7978846
    %v813 = vmul.f32 %v749, 0.7978846
    %v814 = vmul.f32 %v750, 0.7978846
    %v815 = vmul.f32 %v751, 0.7978846
    %v816 = vmul.f32 %v752, 0.7978846
    %v817 = vmul.f32 %v753, 0.7978846
    %v818 = vmul.f32 %v754, 0.7978846
    %v819 = vmul.f32 %v755, 0.7978846
    %v820 = vmul.f32 %v756, 0.7978846
    %v821 = vmul.f32 %v757, 0.7978846
    %v822 = vmul.f32 %v758, 0.7978846
    %v823 = vmul.f32 %v759, 0.7978846
    %v824 = vtanh.pop %v760
    %v825 = vtanh.pop %v761
    %v826 = vtanh.pop %v762
    %v827 = vtanh.pop %v763
    %v828 = vtanh.pop %v764
    %v829 = vtanh.pop %v765
    %v830 = vtanh.pop %v766
    %v831 = vtanh.pop %v767
    %v832 = vtanh.pop %v768
    %v833 = vtanh.pop %v769
    %v834 = vtanh.pop %v770
    %v835 = vtanh.pop %v771
    %v836 = vtanh.pop %v772
    %v837 = vtanh.pop %v773
    %v838 = vtanh.pop %v774
    %v839 = vtanh.pop %v775
    %v840 = vtanh.pop %v776
    %v841 = vtanh.pop %v777
    %v842 = vtanh.pop %v778
    %v843 = vtanh.pop %v779
    %v844 = vtanh.pop %v780
    %v845 = vtanh.pop %v781
    %v846 = vtanh.pop %v782
    %v847 = vtanh.pop %v783
    %v848 = vtanh.pop %v784
    %v849 = vtanh.pop %v785
    %v850 = vtanh.pop %v786
    %v851 = vtanh.pop %v787
    %v852 = vtanh.pop %v788
    %v853 = vtanh.pop %v789
    %v854 = vtanh.pop %v790
    %v855 = vtanh.pop %v791
    %v856 = vtanh.pop %v792
    %v857 = vtanh.pop %v793
    %v858 = vtanh.pop %v794
    %v859 = vtanh.pop %v795
    %v860 = vtanh.pop %v796
    %v861 = vtanh.pop %v797
    %v862 = vtanh.pop %v798
    %v863 = vtanh.pop %v799
    %v864 = vtanh.pop %v800
    %v865 = vtanh.pop %v801
    %v866 = vtanh.pop %v802
    %v867 = vtanh.pop %v803
    %v868 = vtanh.pop %v804
    %v869 = vtanh.pop %v805
    %v870 = vtanh.pop %v806
    %v871 = vtanh.pop %v807
    %v872 = vtanh.pop %v808
    %v873 = vtanh.pop %v809
    %v874 = vtanh.pop %v810
    %v875 = vtanh.pop %v811
    %v876 = vtanh.pop %v812
    %v877 = vtanh.pop %v813
    %v878 = vtanh.pop %v814
    %v879 = vtanh.pop %v815
    %v880 = vtanh.pop %v816
    %v881 = vtanh.pop %v817
    %v882 = vtanh.pop %v818
    %v883 = vtanh.pop %v819
    %v884 = vtanh.pop %v820
    %v885 = vtanh.pop %v821
    %v886 = vtanh.pop %v822
    %v887 = vtanh.pop %v823
    %v888 = vadd.f32 %v824, 1.0
    %v889 = vadd.f32 %v825, 1.0
    %v890 = vadd.f32 %v826, 1.0
    %v891 = vadd.f32 %v827, 1.0
    %v892 = vadd.f32 %v828, 1.0
    %v893 = vadd.f32 %v829, 1.0
    %v894 = vadd.f32 %v830, 1.0
    %v895 = vadd.f32 %v831, 1.0
    %v896 = vadd.f32 %v832, 1.0
    %v897 = vadd.f32 %v833, 1.0
    %v898 = vadd.f32 %v834, 1.0
    %v899 = vadd.f32 %v835, 1.0
    %v900 = vadd.f32 %v836, 1.0
    %v901 = vadd.f32 %v837, 1.0
    %v902 = vadd.f32 %v838, 1.0
    %v903 = vadd.f32 %v839, 1.0
    %v904 = vadd.f32 %v840, 1.0
    %v905 = vadd.f32 %v841, 1.0
    %v906 = vadd.f32 %v842, 1.0
    %v907 = vadd.f32 %v843, 1.0
    %v908 = vadd.f32 %v844, 1.0
    %v909 = vadd.f32 %v845, 1.0
    %v910 = vadd.f32 %v846, 1.0
    %v911 = vadd.f32 %v847, 1.0
    %v912 = vadd.f32 %v848, 1.0
    %v913 = vadd.f32 %v849, 1.0
    %v914 = vadd.f32 %v850, 1.0
    %v915 = vadd.f32 %v851, 1.0
    %v916 = vadd.f32 %v852, 1.0
    %v917 = vadd.f32 %v853, 1.0
    %v918 = vadd.f32 %v854, 1.0
    %v919 = vadd.f32 %v855, 1.0
    %v920 = vadd.f32 %v856, 1.0
    %v921 = vadd.f32 %v857, 1.0
    %v922 = vadd.f32 %v858, 1.0
    %v923 = vadd.f32 %v859, 1.0
    %v924 = vadd.f32 %v860, 1.0
    %v925 = vadd.f32 %v861, 1.0
    %v926 = vadd.f32 %v862, 1.0
    %v927 = vadd.f32 %v863, 1.0
    %v928 = vadd.f32 %v864, 1.0
    %v929 = vadd.f32 %v865, 1.0
    %v930 = vadd.f32 %v866, 1.0
    %v931 = vadd.f32 %v867, 1.0
    %v932 = vadd.f32 %v868, 1.0
    %v933 = vadd.f32 %v869, 1.0
    %v934 = vadd.f32 %v870, 1.0
    %v935 = vadd.f32 %v871, 1.0
    %v936 = vadd.f32 %v872, 1.0
    %v937 = vadd.f32 %v873, 1.0
    %v938 = vadd.f32 %v874, 1.0
    %v939 = vadd.f32 %v875, 1.0
    %v940 = vadd.f32 %v876, 1.0
    %v941 = vadd.f32 %v877, 1.0
    %v942 = vadd.f32 %v878, 1.0
    %v943 = vadd.f32 %v879, 1.0
    %v944 = vadd.f32 %v880, 1.0
    %v945 = vadd.f32 %v881, 1.0
    %v946 = vadd.f32 %v882, 1.0
    %v947 = vadd.f32 %v883, 1.0
    %v948 = vadd.f32 %v884, 1.0
    %v949 = vadd.f32 %v885, 1.0
    %v950 = vadd.f32 %v886, 1.0
    %v951 = vadd.f32 %v887, 1.0
    %v952 = vmul.f32 %v888, 0.5
    %v953 = vmul.f32 %v889, 0.5
    %v954 = vmul.f32 %v890, 0.5
    %v955 = vmul.f32 %v891, 0.5
    %v956 = vmul.f32 %v892, 0.5
    %v957 = vmul.f32 %v893, 0.5
    %v958 = vmul.f32 %v894, 0.5
    %v959 = vmul.f32 %v895, 0.5
    %v960 = vmul.f32 %v896, 0.5
    %v961 = vmul.f32 %v897, 0.5
    %v962 = vmul.f32 %v898, 0.5
    %v963 = vmul.f32 %v899, 0.5
    %v964 = vmul.f32 %v900, 0.5
    %v965 = vmul.f32 %v901, 0.5
    %v966 = vmul.f32 %v902, 0.5
    %v967 = vmul.f32 %v903, 0.5
    %v968 = vmul.f32 %v904, 0.5
    %v969 = vmul.f32 %v905, 0.5
    %v970 = vmul.f32 %v906, 0.5
    %v971 = vmul.f32 %v907, 0.5
    %v972 = vmul.f32 %v908, 0.5
    %v973 = vmul.f32 %v909, 0.5
    %v974 = vmul.f32 %v910, 0.5
    %v975 = vmul.f32 %v911, 0.5
    %v976 = vmul.f32 %v912, 0.5
    %v977 = vmul.f32 %v913, 0.5
    %v978 = vmul.f32 %v914, 0.5
    %v979 = vmul.f32 %v915, 0.5
    %v980 = vmul.f32 %v916, 0.5
    %v981 = vmul.f32 %v917, 0.5
    %v982 = vmul.f32 %v918, 0.5
    %v983 = vmul.f32 %v919, 0.5
    %v984 = vmul.f32 %v920, 0.5
    %v985 = vmul.f32 %v921, 0.5
    %v986 = vmul.f32 %v922, 0.5
    %v987 = vmul.f32 %v923, 0.5
    %v988 = vmul.f32 %v924, 0.5
    %v989 = vmul.f32 %v925, 0.5
    %v990 = vmul.f32 %v926, 0.5
    %v991 = vmul.f32 %v927, 0.5
    %v992 = vmul.f32 %v928, 0.5
    %v993 = vmul.f32 %v929, 0.5
    %v994 = vmul.f32 %v930, 0.5
    %v995 = vmul.f32 %v931, 0.5
    %v996 = vmul.f32 %v932, 0.5
    %v997 = vmul.f32 %v933, 0.5
    %v998 = vmul.f32 %v934, 0.5
    %v999 = vmul.f32 %v935, 0.5
    %v1000 = vmul.f32 %v936, 0.5
    %v1001 = vmul.f32 %v937, 0.5
    %v1002 = vmul.f32 %v938, 0.5
    %v1003 = vmul.f32 %v939, 0.5
    %v1004 = vmul.f32 %v940, 0.5
    %v1005 = vmul.f32 %v941, 0.5
    %v1006 = vmul.f32 %v942, 0.5
    %v1007 = vmul.f32 %v943, 0.5
    %v1008 = vmul.f32 %v944, 0.5
    %v1009 = vmul.f32 %v945, 0.5
    %v1010 = vmul.f32 %v946, 0.5
    %v1011 = vmul.f32 %v947, 0.5
    %v1012 = vmul.f32 %v948, 0.5
    %v1013 = vmul.f32 %v949, 0.5
    %v1014 = vmul.f32 %v950, 0.5
    %v1015 = vmul.f32 %v951, 0.5
    %v1016 = vmul.f32 %v318, %v952
    %v1017 = vmul.f32 %v367, %v953
    %v1018 = vmul.f32 %v416, %v954
    %v1019 = vmul.f32 %v465, %v955
    %v1020 = vmul.f32 %v320, %v956
    %v1021 = vmul.f32 %v369, %v957
    %v1022 = vmul.f32 %v418, %v958
    %v1023 = vmul.f32 %v467, %v959
    %v1024 = vmul.f32 %v323, %v960
    %v1025 = vmul.f32 %v372, %v961
    %v1026 = vmul.f32 %v421, %v962
    %v1027 = vmul.f32 %v470, %v963
    %v1028 = vmul.f32 %v325, %v964
    %v1029 = vmul.f32 %v374, %v965
    %v1030 = vmul.f32 %v423, %v966
    %v1031 = vmul.f32 %v472, %v967
    %v1032 = vmul.f32 %v328, %v968
    %v1033 = vmul.f32 %v377, %v969
    %v1034 = vmul.f32 %v426, %v970
    %v1035 = vmul.f32 %v475, %v971
    %v1036 = vmul.f32 %v330, %v972
    %v1037 = vmul.f32 %v379, %v973
    %v1038 = vmul.f32 %v428, %v974
    %v1039 = vmul.f32 %v477, %v975
    %v1040 = vmul.f32 %v333, %v976
    %v1041 = vmul.f32 %v382, %v977
    %v1042 = vmul.f32 %v431, %v978
    %v1043 = vmul.f32 %v480, %v979
    %v1044 = vmul.f32 %v335, %v980
    %v1045 = vmul.f32 %v384, %v981
    %v1046 = vmul.f32 %v433, %v982
    %v1047 = vmul.f32 %v482, %v983
    %v1048 = vmul.f32 %v338, %v984
    %v1049 = vmul.f32 %v387, %v985
    %v1050 = vmul.f32 %v436, %v986
    %v1051 = vmul.f32 %v485, %v987
    %v1052 = vmul.f32 %v340, %v988
    %v1053 = vmul.f32 %v389, %v989
    %v1054 = vmul.f32 %v438, %v990
    %v1055 = vmul.f32 %v487, %v991
    %v1056 = vmul.f32 %v343, %v992
    %v1057 = vmul.f32 %v392, %v993
    %v1058 = vmul.f32 %v441, %v994
    %v1059 = vmul.f32 %v490, %v995
    %v1060 = vmul.f32 %v345, %v996
    %v1061 = vmul.f32 %v394, %v997
    %v1062 = vmul.f32 %v443, %v998
    %v1063 = vmul.f32 %v492, %v999
    %v1064 = vmul.f32 %v348, %v1000
    %v1065 = vmul.f32 %v397, %v1001
    %v1066 = vmul.f32 %v446, %v1002
    %v1067 = vmul.f32 %v495, %v1003
    %v1068 = vmul.f32 %v350, %v1004
    %v1069 = vmul.f32 %v399, %v1005
    %v1070 = vmul.f32 %v448, %v1006
    %v1071 = vmul.f32 %v497, %v1007
    %v1072 = vmul.f32 %v353, %v1008
    %v1073 = vmul.f32 %v402, %v1009
    %v1074 = vmul.f32 %v451, %v1010
    %v1075 = vmul.f32 %v500, %v1011
    %v1076 = vmul.f32 %v355, %v1012
    %v1077 = vmul.f32 %v404, %v1013
    %v1078 = vmul.f32 %v453, %v1014
    %v1079 = vmul.f32 %v502, %v1015
    %v1080 = vpack.c.bf16 %v1020, %v1016
    %v1081 = vpack.c.bf16 %v1021, %v1017
    %v1082 = vpack.c.bf16 %v1022, %v1018
    %v1083 = vpack.c.bf16 %v1023, %v1019
    %v1084 = vpack.c.bf16 %v1028, %v1024
    %v1085 = vpack.c.bf16 %v1029, %v1025
    %v1086 = vpack.c.bf16 %v1030, %v1026
    %v1087 = vpack.c.bf16 %v1031, %v1027
    %v1088 = vpack.c.bf16 %v1036, %v1032
    %v1089 = vpack.c.bf16 %v1037, %v1033
    %v1090 = vpack.c.bf16 %v1038, %v1034
    %v1091 = vpack.c.bf16 %v1039, %v1035
    %v1092 = vpack.c.bf16 %v1044, %v1040
    %v1093 = vpack.c.bf16 %v1045, %v1041
    %v1094 = vpack.c.bf16 %v1046, %v1042
    %v1095 = vpack.c.bf16 %v1047, %v1043
    %v1096 = vpack.c.bf16 %v1052, %v1048
    %v1097 = vpack.c.bf16 %v1053, %v1049
    %v1098 = vpack.c.bf16 %v1054, %v1050
    %v1099 = vpack.c.bf16 %v1055, %v1051
    %v1100 = vpack.c.bf16 %v1060, %v1056
    %v1101 = vpack.c.bf16 %v1061, %v1057
    %v1102 = vpack.c.bf16 %v1062, %v1058
    %v1103 = vpack.c.bf16 %v1063, %v1059
    %v1104 = vpack.c.bf16 %v1068, %v1064
    %v1105 = vpack.c.bf16 %v1069, %v1065
    %v1106 = vpack.c.bf16 %v1070, %v1066
    %v1107 = vpack.c.bf16 %v1071, %v1067
    %v1108 = vpack.c.bf16 %v1076, %v1072
    %v1109 = vpack.c.bf16 %v1077, %v1073
    %v1110 = vpack.c.bf16 %v1078, %v1074
    %v1111 = vpack.c.bf16 %v1079, %v1075
    %v1112 = vld [vmem:[#allocation8] sm:$0xf]
    %v1113 = vld [vmem:[#allocation8 + $0x4] sm:$0xf]
    %v1114 = vld [vmem:[#allocation8 + $0x8] sm:$0xf]
    %v1115 = vld [vmem:[#allocation8 + $0xc] sm:$0xf]
    %v1116 = vld [vmem:[#allocation8 + $0x10] sm:$0xf]
    %v1117 = vld [vmem:[#allocation8 + $0x14] sm:$0xf]
    %v1118 = vld [vmem:[#allocation8 + $0x18] sm:$0xf]
    %v1119 = vld [vmem:[#allocation8 + $0x1c] sm:$0xf]
    %v1120 = vld [vmem:[#allocation8 + $0x20] sm:$0xf]
    %v1121 = vld [vmem:[#allocation8 + $0x24] sm:$0xf]
    %v1122 = vld [vmem:[#allocation8 + $0x28] sm:$0xf]
    %v1123 = vld [vmem:[#allocation8 + $0x2c] sm:$0xf]
    %v1124 = vld [vmem:[#allocation8 + $0x30] sm:$0xf]
    %v1125 = vld [vmem:[#allocation8 + $0x34] sm:$0xf]
    %v1126 = vld [vmem:[#allocation8 + $0x38] sm:$0xf]
    %v1127 = vld [vmem:[#allocation8 + $0x3c] sm:$0xf]
    %v1128 = vld [vmem:[#allocation8 + $0x40] sm:$0xf]
    %v1129 = vld [vmem:[#allocation8 + $0x44] sm:$0xf]
    %v1130 = vld [vmem:[#allocation8 + $0x48] sm:$0xf]
    %v1131 = vld [vmem:[#allocation8 + $0x4c] sm:$0xf]
    %v1132 = vld [vmem:[#allocation8 + $0x50] sm:$0xf]
    %v1133 = vld [vmem:[#allocation8 + $0x54] sm:$0xf]
    %v1134 = vld [vmem:[#allocation8 + $0x58] sm:$0xf]
    %v1135 = vld [vmem:[#allocation8 + $0x5c] sm:$0xf]
    %v1136 = vld [vmem:[#allocation8 + $0x60] sm:$0xf]
    %v1137 = vld [vmem:[#allocation8 + $0x64] sm:$0xf]
    %v1138 = vld [vmem:[#allocation8 + $0x68] sm:$0xf]
    %v1139 = vld [vmem:[#allocation8 + $0x6c] sm:$0xf]
    %v1140 = vld [vmem:[#allocation8 + $0x70] sm:$0xf]
    %v1141 = vld [vmem:[#allocation8 + $0x74] sm:$0xf]
    %v1142 = vld [vmem:[#allocation8 + $0x78] sm:$0xf]
    %v1143 = vld [vmem:[#allocation8 + $0x7c] sm:$0xf]
    %v1144 = vld [vmem:[#allocation8 + $0x80] sm:$0xf]
    %v1145 = vld [vmem:[#allocation8 + $0x84] sm:$0xf]
    %v1146 = vld [vmem:[#allocation8 + $0x88] sm:$0xf]
    %v1147 = vld [vmem:[#allocation8 + $0x8c] sm:$0xf]
    %v1148 = vld [vmem:[#allocation8 + $0x90] sm:$0xf]
    %v1149 = vld [vmem:[#allocation8 + $0x94] sm:$0xf]
    %v1150 = vld [vmem:[#allocation8 + $0x98] sm:$0xf]
    %v1151 = vld [vmem:[#allocation8 + $0x9c] sm:$0xf]
    %v1152 = vld [vmem:[#allocation8 + $0xa0] sm:$0xf]
    %v1153 = vld [vmem:[#allocation8 + $0xa4] sm:$0xf]
    %v1154 = vld [vmem:[#allocation8 + $0xa8] sm:$0xf]
    %v1155 = vld [vmem:[#allocation8 + $0xac] sm:$0xf]
    %v1156 = vld [vmem:[#allocation8 + $0xb0] sm:$0xf]
    %v1157 = vld [vmem:[#allocation8 + $0xb4] sm:$0xf]
    %v1158 = vld [vmem:[#allocation8 + $0xb8] sm:$0xf]
    %v1159 = vld [vmem:[#allocation8 + $0xbc] sm:$0xf]
    %v1160 = vld [vmem:[#allocation8 + $0xc0] sm:$0xf]
    %v1161 = vld [vmem:[#allocation8 + $0xc4] sm:$0xf]
    %v1162 = vld [vmem:[#allocation8 + $0xc8] sm:$0xf]
    %v1163 = vld [vmem:[#allocation8 + $0xcc] sm:$0xf]
    %v1164 = vld [vmem:[#allocation8 + $0xd0] sm:$0xf]
    %v1165 = vld [vmem:[#allocation8 + $0xd4] sm:$0xf]
    %v1166 = vld [vmem:[#allocation8 + $0xd8] sm:$0xf]
    %v1167 = vld [vmem:[#allocation8 + $0xdc] sm:$0xf]
    %v1168 = vld [vmem:[#allocation8 + $0xe0] sm:$0xf]
    %v1169 = vld [vmem:[#allocation8 + $0xe4] sm:$0xf]
    %v1170 = vld [vmem:[#allocation8 + $0xe8] sm:$0xf]
    %v1171 = vld [vmem:[#allocation8 + $0xec] sm:$0xf]
    %v1172 = vld [vmem:[#allocation8 + $0xf0] sm:$0xf]
    %v1173 = vld [vmem:[#allocation8 + $0xf4] sm:$0xf]
    %v1174 = vld [vmem:[#allocation8 + $0xf8] sm:$0xf]
    %v1175 = vld [vmem:[#allocation8 + $0xfc] sm:$0xf]
    %v1176 = vld [vmem:[%s4] sm:$0x1]
    %v1178 = vperm.slane %v1176, 0
    %v1244 = vunpack.c.l.b16 %v1112
    %v1245 = vunpack.c.l.b16 %v1113
    %v1246 = vunpack.c.l.b16 %v1114
    %v1247 = vunpack.c.l.b16 %v1115
    %v1248 = vunpack.c.l.b16 %v1116
    %v1249 = vunpack.c.l.b16 %v1117
    %v1250 = vunpack.c.l.b16 %v1118
    %v1251 = vunpack.c.l.b16 %v1119
    %v1252 = vunpack.c.l.b16 %v1120
    %v1253 = vunpack.c.l.b16 %v1121
    %v1254 = vunpack.c.l.b16 %v1122
    %v1255 = vunpack.c.l.b16 %v1123
    %v1256 = vunpack.c.l.b16 %v1124
    %v1257 = vunpack.c.l.b16 %v1125
    %v1258 = vunpack.c.l.b16 %v1126
    %v1259 = vunpack.c.l.b16 %v1127
    %v1260 = vunpack.c.l.b16 %v1128
    %v1261 = vunpack.c.l.b16 %v1129
    %v1262 = vunpack.c.l.b16 %v1130
    %v1263 = vunpack.c.l.b16 %v1131
    %v1264 = vunpack.c.l.b16 %v1132
    %v1265 = vunpack.c.l.b16 %v1133
    %v1266 = vunpack.c.l.b16 %v1134
    %v1267 = vunpack.c.l.b16 %v1135
    %v1268 = vunpack.c.l.b16 %v1136
    %v1269 = vunpack.c.l.b16 %v1137
    %v1270 = vunpack.c.l.b16 %v1138
    %v1271 = vunpack.c.l.b16 %v1139
    %v1272 = vunpack.c.l.b16 %v1140
    %v1273 = vunpack.c.l.b16 %v1141
    %v1274 = vunpack.c.l.b16 %v1142
    %v1275 = vunpack.c.l.b16 %v1143
    %v1276 = vunpack.c.l.b16 %v1144
    %v1277 = vunpack.c.l.b16 %v1145
    %v1278 = vunpack.c.l.b16 %v1146
    %v1279 = vunpack.c.l.b16 %v1147
    %v1280 = vunpack.c.l.b16 %v1148
    %v1281 = vunpack.c.l.b16 %v1149
    %v1282 = vunpack.c.l.b16 %v1150
    %v1283 = vunpack.c.l.b16 %v1151
    %v1284 = vunpack.c.l.b16 %v1152
    %v1285 = vunpack.c.l.b16 %v1153
    %v1286 = vunpack.c.l.b16 %v1154
    %v1287 = vunpack.c.l.b16 %v1155
    %v1288 = vunpack.c.l.b16 %v1156
    %v1289 = vunpack.c.l.b16 %v1157
    %v1290 = vunpack.c.l.b16 %v1158
    %v1291 = vunpack.c.l.b16 %v1159
    %v1292 = vunpack.c.l.b16 %v1160
    %v1293 = vunpack.c.l.b16 %v1161
    %v1294 = vunpack.c.l.b16 %v1162
    %v1295 = vunpack.c.l.b16 %v1163
    %v1296 = vunpack.c.l.b16 %v1164
    %v1297 = vunpack.c.l.b16 %v1165
    %v1298 = vunpack.c.l.b16 %v1166
    %v1299 = vunpack.c.l.b16 %v1167
    %v1300 = vunpack.c.l.b16 %v1168
    %v1301 = vunpack.c.l.b16 %v1169
    %v1302 = vunpack.c.l.b16 %v1170
    %v1303 = vunpack.c.l.b16 %v1171
    %v1304 = vunpack.c.l.b16 %v1172
    %v1305 = vunpack.c.l.b16 %v1173
    %v1306 = vunpack.c.l.b16 %v1174
    %v1307 = vunpack.c.l.b16 %v1175
    %v1308 = vpack.c.b16 %v1245, %v1244
    %v1309 = vpack.c.b16 %v1247, %v1246
    %v1310 = vpack.c.b16 %v1249, %v1248
    %v1311 = vpack.c.b16 %v1251, %v1250
    %v1312 = vpack.c.b16 %v1253, %v1252
    %v1313 = vpack.c.b16 %v1255, %v1254
    %v1314 = vpack.c.b16 %v1257, %v1256
    %v1315 = vpack.c.b16 %v1259, %v1258
    %v1316 = vpack.c.b16 %v1261, %v1260
    %v1317 = vpack.c.b16 %v1263, %v1262
    %v1318 = vpack.c.b16 %v1265, %v1264
    %v1319 = vpack.c.b16 %v1267, %v1266
    %v1320 = vpack.c.b16 %v1269, %v1268
    %v1321 = vpack.c.b16 %v1271, %v1270
    %v1322 = vpack.c.b16 %v1273, %v1272
    %v1323 = vpack.c.b16 %v1275, %v1274
    %v1324 = vpack.c.b16 %v1277, %v1276
    %v1325 = vpack.c.b16 %v1279, %v1278
    %v1326 = vpack.c.b16 %v1281, %v1280
    %v1327 = vpack.c.b16 %v1283, %v1282
    %v1328 = vpack.c.b16 %v1285, %v1284
    %v1329 = vpack.c.b16 %v1287, %v1286
    %v1330 = vpack.c.b16 %v1289, %v1288
    %v1331 = vpack.c.b16 %v1291, %v1290
    %v1332 = vpack.c.b16 %v1293, %v1292
    %v1333 = vpack.c.b16 %v1295, %v1294
    %v1334 = vpack.c.b16 %v1297, %v1296
    %v1335 = vpack.c.b16 %v1299, %v1298
    %v1336 = vpack.c.b16 %v1301, %v1300
    %v1337 = vpack.c.b16 %v1303, %v1302
    %v1338 = vpack.c.b16 %v1305, %v1304
    %v1339 = vpack.c.b16 %v1307, %v1306
    %1372 = vmatpush.bf16.msra.mxu0 %v1315
    %1373 = vmatpush.bf16.msra.mxu0 %v1314
    %1374 = vmatpush.bf16.msra.mxu0 %v1313
    %1375 = vmatpush.bf16.msra.mxu0 %v1312
    %1376 = vmatpush.bf16.msra.mxu0 %v1311
    %1377 = vmatpush.bf16.msra.mxu0 %v1310
    %1378 = vmatpush.bf16.msra.mxu0 %v1309
    %1379 = vmatpush.bf16.msra.mxu0 %v1308
    %1380 = vmatmul.bf16.gmra.mxu0 %v1080
    %v1381 = vpop.f32.mrf.mxu0
    %v1382 = vadd.f32 %v1178, %v1381
    %v1383 = vpop.f32.mrf.mxu0
    %v1384 = vadd.f32 %v1178, %v1383
    %1385 = vmatmul.bf16.gmra.mxu0 %v1084
    %v1386 = vpop.f32.mrf.mxu0
    %v1387 = vadd.f32 %v1178, %v1386
    %v1388 = vpop.f32.mrf.mxu0
    %v1389 = vadd.f32 %v1178, %v1388
    %1390 = vmatmul.bf16.gmra.mxu0 %v1088
    %v1391 = vpop.f32.mrf.mxu0
    %v1392 = vadd.f32 %v1178, %v1391
    %v1393 = vpop.f32.mrf.mxu0
    %v1394 = vadd.f32 %v1178, %v1393
    %1395 = vmatmul.bf16.gmra.mxu0 %v1092
    %v1396 = vpop.f32.mrf.mxu0
    %v1397 = vadd.f32 %v1178, %v1396
    %v1398 = vpop.f32.mrf.mxu0
    %v1399 = vadd.f32 %v1178, %v1398
    %1400 = vmatmul.bf16.gmra.mxu0 %v1096
    %v1401 = vpop.f32.mrf.mxu0
    %v1402 = vadd.f32 %v1178, %v1401
    %v1403 = vpop.f32.mrf.mxu0
    %v1404 = vadd.f32 %v1178, %v1403
    %1405 = vmatmul.bf16.gmra.mxu0 %v1100
    %v1406 = vpop.f32.mrf.mxu0
    %v1407 = vadd.f32 %v1178, %v1406
    %v1408 = vpop.f32.mrf.mxu0
    %v1409 = vadd.f32 %v1178, %v1408
    %1410 = vmatmul.bf16.gmra.mxu0 %v1104
    %v1411 = vpop.f32.mrf.mxu0
    %v1412 = vadd.f32 %v1178, %v1411
    %v1413 = vpop.f32.mrf.mxu0
    %v1414 = vadd.f32 %v1178, %v1413
    %1415 = vmatmul.bf16.gmra.mxu0 %v1108
    %v1416 = vpop.f32.mrf.mxu0
    %v1417 = vadd.f32 %v1178, %v1416
    %v1418 = vpop.f32.mrf.mxu0
    %v1419 = vadd.f32 %v1178, %v1418
    %1420 = vdwg.mxu0
    %1421 = vmatpush.bf16.msra.mxu0 %v1323
    %1422 = vmatpush.bf16.msra.mxu0 %v1322
    %1423 = vmatpush.bf16.msra.mxu0 %v1321
    %1424 = vmatpush.bf16.msra.mxu0 %v1320
    %1425 = vmatpush.bf16.msra.mxu0 %v1319
    %1426 = vmatpush.bf16.msra.mxu0 %v1318
    %1427 = vmatpush.bf16.msra.mxu0 %v1317
    %1428 = vmatpush.bf16.msra.mxu0 %v1316
    %1429 = vmatmul.bf16.gmra.mxu0 %v1081
    %v1430 = vpop.f32.mrf.mxu0
    %v1431 = vadd.f32 %v1382, %v1430
    %v1432 = vpop.f32.mrf.mxu0
    %v1433 = vadd.f32 %v1384, %v1432
    %1434 = vmatmul.bf16.gmra.mxu0 %v1085
    %v1435 = vpop.f32.mrf.mxu0
    %v1436 = vadd.f32 %v1387, %v1435
    %v1437 = vpop.f32.mrf.mxu0
    %v1438 = vadd.f32 %v1389, %v1437
    %1439 = vmatmul.bf16.gmra.mxu0 %v1089
    %v1440 = vpop.f32.mrf.mxu0
    %v1441 = vadd.f32 %v1392, %v1440
    %v1442 = vpop.f32.mrf.mxu0
    %v1443 = vadd.f32 %v1394, %v1442
    %1444 = vmatmul.bf16.gmra.mxu0 %v1093
    %v1445 = vpop.f32.mrf.mxu0
    %v1446 = vadd.f32 %v1397, %v1445
    %v1447 = vpop.f32.mrf.mxu0
    %v1448 = vadd.f32 %v1399, %v1447
    %1449 = vmatmul.bf16.gmra.mxu0 %v1097
    %v1450 = vpop.f32.mrf.mxu0
    %v1451 = vadd.f32 %v1402, %v1450
    %v1452 = vpop.f32.mrf.mxu0
    %v1453 = vadd.f32 %v1404, %v1452
    %1454 = vmatmul.bf16.gmra.mxu0 %v1101
    %v1455 = vpop.f32.mrf.mxu0
    %v1456 = vadd.f32 %v1407, %v1455
    %v1457 = vpop.f32.mrf.mxu0
    %v1458 = vadd.f32 %v1409, %v1457
    %1459 = vmatmul.bf16.gmra.mxu0 %v1105
    %v1460 = vpop.f32.mrf.mxu0
    %v1461 = vadd.f32 %v1412, %v1460
    %v1462 = vpop.f32.mrf.mxu0
    %v1463 = vadd.f32 %v1414, %v1462
    %1464 = vmatmul.bf16.gmra.mxu0 %v1109
    %v1465 = vpop.f32.mrf.mxu0
    %v1466 = vadd.f32 %v1417, %v1465
    %v1467 = vpop.f32.mrf.mxu0
    %v1468 = vadd.f32 %v1419, %v1467
    %1469 = vdwg.mxu0
    %1470 = vmatpush.bf16.msra.mxu0 %v1331
    %1471 = vmatpush.bf16.msra.mxu0 %v1330
    %1472 = vmatpush.bf16.msra.mxu0 %v1329
    %1473 = vmatpush.bf16.msra.mxu0 %v1328
    %1474 = vmatpush.bf16.msra.mxu0 %v1327
    %1475 = vmatpush.bf16.msra.mxu0 %v1326
    %1476 = vmatpush.bf16.msra.mxu0 %v1325
    %1477 = vmatpush.bf16.msra.mxu0 %v1324
    %1478 = vmatmul.bf16.gmra.mxu0 %v1082
    %v1479 = vpop.f32.mrf.mxu0
    %v1480 = vadd.f32 %v1431, %v1479
    %v1481 = vpop.f32.mrf.mxu0
    %v1482 = vadd.f32 %v1433, %v1481
    %1483 = vmatmul.bf16.gmra.mxu0 %v1086
    %v1484 = vpop.f32.mrf.mxu0
    %v1485 = vadd.f32 %v1436, %v1484
    %v1486 = vpop.f32.mrf.mxu0
    %v1487 = vadd.f32 %v1438, %v1486
    %1488 = vmatmul.bf16.gmra.mxu0 %v1090
    %v1489 = vpop.f32.mrf.mxu0
    %v1490 = vadd.f32 %v1441, %v1489
    %v1491 = vpop.f32.mrf.mxu0
    %v1492 = vadd.f32 %v1443, %v1491
    %1493 = vmatmul.bf16.gmra.mxu0 %v1094
    %v1494 = vpop.f32.mrf.mxu0
    %v1495 = vadd.f32 %v1446, %v1494
    %v1496 = vpop.f32.mrf.mxu0
    %v1497 = vadd.f32 %v1448, %v1496
    %1498 = vmatmul.bf16.gmra.mxu0 %v1098
    %v1499 = vpop.f32.mrf.mxu0
    %v1500 = vadd.f32 %v1451, %v1499
    %v1501 = vpop.f32.mrf.mxu0
    %v1502 = vadd.f32 %v1453, %v1501
    %1503 = vmatmul.bf16.gmra.mxu0 %v1102
    %v1504 = vpop.f32.mrf.mxu0
    %v1505 = vadd.f32 %v1456, %v1504
    %v1506 = vpop.f32.mrf.mxu0
    %v1507 = vadd.f32 %v1458, %v1506
    %1508 = vmatmul.bf16.gmra.mxu0 %v1106
    %v1509 = vpop.f32.mrf.mxu0
    %v1510 = vadd.f32 %v1461, %v1509
    %v1511 = vpop.f32.mrf.mxu0
    %v1512 = vadd.f32 %v1463, %v1511
    %1513 = vmatmul.bf16.gmra.mxu0 %v1110
    %v1514 = vpop.f32.mrf.mxu0
    %v1515 = vadd.f32 %v1466, %v1514
    %v1516 = vpop.f32.mrf.mxu0
    %v1517 = vadd.f32 %v1468, %v1516
    %1518 = vdwg.mxu0
    %1519 = vmatpush.bf16.msra.mxu0 %v1339
    %1520 = vmatpush.bf16.msra.mxu0 %v1338
    %1521 = vmatpush.bf16.msra.mxu0 %v1337
    %1522 = vmatpush.bf16.msra.mxu0 %v1336
    %1523 = vmatpush.bf16.msra.mxu0 %v1335
    %1524 = vmatpush.bf16.msra.mxu0 %v1334
    %1525 = vmatpush.bf16.msra.mxu0 %v1333
    %1526 = vmatpush.bf16.msra.mxu0 %v1332
    %1527 = vmatmul.bf16.gmra.mxu0 %v1083
    %v1528 = vpop.f32.mrf.mxu0
    %v1529 = vadd.f32 %v1480, %v1528
    %v1530 = vpop.f32.mrf.mxu0
    %v1531 = vadd.f32 %v1482, %v1530
    %1532 = vmatmul.bf16.gmra.mxu0 %v1087
    %v1533 = vpop.f32.mrf.mxu0
    %v1534 = vadd.f32 %v1485, %v1533
    %v1535 = vpop.f32.mrf.mxu0
    %v1536 = vadd.f32 %v1487, %v1535
    %1537 = vmatmul.bf16.gmra.mxu0 %v1091
    %v1538 = vpop.f32.mrf.mxu0
    %v1539 = vadd.f32 %v1490, %v1538
    %v1540 = vpop.f32.mrf.mxu0
    %v1541 = vadd.f32 %v1492, %v1540
    %1542 = vmatmul.bf16.gmra.mxu0 %v1095
    %v1543 = vpop.f32.mrf.mxu0
    %v1544 = vadd.f32 %v1495, %v1543
    %v1545 = vpop.f32.mrf.mxu0
    %v1546 = vadd.f32 %v1497, %v1545
    %1547 = vmatmul.bf16.gmra.mxu0 %v1099
    %v1548 = vpop.f32.mrf.mxu0
    %v1549 = vadd.f32 %v1500, %v1548
    %v1550 = vpop.f32.mrf.mxu0
    %v1551 = vadd.f32 %v1502, %v1550
    %1552 = vmatmul.bf16.gmra.mxu0 %v1103
    %v1553 = vpop.f32.mrf.mxu0
    %v1554 = vadd.f32 %v1505, %v1553
    %v1555 = vpop.f32.mrf.mxu0
    %v1556 = vadd.f32 %v1507, %v1555
    %1557 = vmatmul.bf16.gmra.mxu0 %v1107
    %v1558 = vpop.f32.mrf.mxu0
    %v1559 = vadd.f32 %v1510, %v1558
    %v1560 = vpop.f32.mrf.mxu0
    %v1561 = vadd.f32 %v1512, %v1560
    %1562 = vmatmul.bf16.gmra.mxu0 %v1111
    %v1563 = vpop.f32.mrf.mxu0
    %v1564 = vadd.f32 %v1515, %v1563
    %v1565 = vpop.f32.mrf.mxu0
    %v1566 = vadd.f32 %v1517, %v1565
    %1567 = vdwg.mxu0
    %1568 = vst [vmem:[#allocation10] sm:$0xff] %v1529
    %1569 = vst [vmem:[#allocation10 + $0x8] sm:$0xff] %v1531
    %1570 = vst [vmem:[#allocation10 + $0x10] sm:$0xff] %v1534
    %1571 = vst [vmem:[#allocation10 + $0x18] sm:$0xff] %v1536
    %1572 = vst [vmem:[#allocation10 + $0x20] sm:$0xff] %v1539
    %1573 = vst [vmem:[#allocation10 + $0x28] sm:$0xff] %v1541
    %1574 = vst [vmem:[#allocation10 + $0x30] sm:$0xff] %v1544
    %1575 = vst [vmem:[#allocation10 + $0x38] sm:$0xff] %v1546
    %1576 = vst [vmem:[#allocation10 + $0x40] sm:$0xff] %v1549
    %1577 = vst [vmem:[#allocation10 + $0x48] sm:$0xff] %v1551
    %1578 = vst [vmem:[#allocation10 + $0x50] sm:$0xff] %v1554
    %1579 = vst [vmem:[#allocation10 + $0x58] sm:$0xff] %v1556
    %1580 = vst [vmem:[#allocation10 + $0x60] sm:$0xff] %v1559
    %1581 = vst [vmem:[#allocation10 + $0x68] sm:$0xff] %v1561
    %1582 = vst [vmem:[#allocation10 + $0x70] sm:$0xff] %v1564
    %1583 = vst [vmem:[#allocation10 + $0x78] sm:$0xff] %v1566
    // Predicated region
    $region38: #{tpu_custom_call.1} parent=1 // pred_check
      _
    $region39: #{tpu_custom_call.1} parent=1 // pred_check_branch
      %1585 = sbr.rel (0) target = $region41
    $region40: #{tpu_custom_call.1} parent=1 // pred_region
      %1587 = vsyncadd [#allocation4], 0
      %s1588 = sshll.u32 [#allocation10], 4
      %s1589 = int_to_ptr.vmem [resolvable:$true] %s1588
      %s1590 = sshll.u32 %s5, 4
      %s1591 = int_to_ptr.hbm [resolvable:$true] %s1590
      %1596 = dma.vmem_to_hbm [thread:$0]  %s1589, 2048, %s1591, [#allocation4], 128, 128, 8
    $region41: #{tpu_custom_call.1} parent=1 // pred_fallthru
      _
    // Predicated region
    $region42: #{tpu_custom_call.1} parent=1 // pred_check
      _
    $region43: #{tpu_custom_call.1} parent=1 // pred_check_branch
      %1598 = sbr.rel (0) target = $region45
    $region44: #{tpu_custom_call.1} parent=1 // pred_region
      %1600 = dma.done [#allocation4], 2048
    $region45: #{tpu_custom_call.1} parent=1 // pred_fallthru
      _
    %1601 = vsyncpa [#allocation3], 1
    %1602 = vsyncpa [#allocation6], 1
    %1603 = vsyncpa [#allocation9], 1
    %1604 = vsyncpa [#allocation4], 1

</llo_original>
